<compile_context>
chip_gen: v6e
topology: v6e:2x2x1
jax: 0.10.0
libtpu: 0.0.40
codegen_flags: <defaults>
</compile_context>

<pallas_src>
import jax
import jax.numpy as jnp
from jax.experimental import pallas as pl
from jax.experimental.pallas import tpu as pltpu

IN0, HID, OUT = 10, 20, 16          # nn.Linear(10, 20), nn.Linear(20, 16)
PACK = 8                            # batch rows packed per sublane-row
PIN, PHID, POUT = PACK * IN0, PACK * HID, PACK * OUT   # 80, 160, 128


def simplenet_kernel(x_ref, w0_ref, b0_ref, w1_ref, b1_ref, o_ref):
    # x_ref: (tb8, 80)  -- 8 batch rows x 10 features per sublane-row (natural-layout view)
    # o_ref: (tb8, 128) -- 8 batch rows x 16 features per sublane-row (natural-layout view)
    # Weights are the 8x block-diagonal expansions, so both matmuls are ordinary
    # dense (M,K)x(K,N) MXU ops and the result is already in natural flat layout.
    x = x_ref[...].astype(jnp.float32)                       # X.float()
    h = jnp.dot(x, w0_ref[...],
                preferred_element_type=jnp.float32,
                precision=jax.lax.Precision.HIGHEST) + b0_ref[...]
    h = jnp.maximum(h, 0.0)                                  # ReLU
    y = jnp.dot(h, w1_ref[...],
                preferred_element_type=jnp.float32,
                precision=jax.lax.Precision.HIGHEST) + b1_ref[...]
    o_ref[...] = y.astype(o_ref.dtype)                       # lane-dense store


def _round_up(a, b):
    return pl.cdiv(a, b) * b


def simplenet_forward(x, w0, b0, w1, b1, *, tile_batch=32768):
    """SimpleNet forward: relu(x @ w0.T + b0) @ w1.T + b1.

    x:  (batch, 10)  (cast to float32, matching X.float(); bf16/f16 are upcast in-kernel)
    w0: (20, 10), b0: (20,)   -- PyTorch nn.Linear (out_features, in_features) layout
    w1: (16, 20), b1: (16,)
    returns (batch, 16) float32

    tile_batch: batch rows per grid step.  ~32768 is a safe default on all chips;
    sweep up to ~131072 on v6e (plentiful VMEM), keep <= ~65536 on v7x (64 MiB/TC).
    """
    batch = x.shape[0]
    assert x.shape[1] == IN0

    # X.float(): keep half dtypes and upcast in-kernel (halves input HBM read);
    # any other dtype is cast to f32 here.
    if x.dtype not in (jnp.float32, jnp.bfloat16, jnp.float16):
        x = x.astype(jnp.float32)

    # --- pack 8 batch rows per sublane-row (metadata-only reshape when batch % 8 == 0) ---
    pbatch = _round_up(batch, PACK)
    if pbatch != batch:
        # Zero-pad (NOT garbage): padded rows share a packed sublane-row with real rows,
        # so they must be finite to never contaminate real outputs.
        x = jnp.pad(x, ((0, pbatch - batch), (0, 0)))
    rows8 = pbatch // PACK
    xp = x.reshape(rows8, PIN)                                # (rows8, 80), row-major view

    # --- fold the row packing into the weights: 8x block-diagonal Linear layers ---
    f32 = jnp.float32
    eye = jnp.eye(PACK, dtype=f32)
    w0p = jnp.kron(eye, w0.astype(f32).T)                     # (80, 160)
    w1p = jnp.kron(eye, w1.astype(f32).T)                     # (160, 128)
    b0p = jnp.tile(b0.astype(f32), PACK).reshape(1, PHID)     # (1, 160)
    b1p = jnp.tile(b1.astype(f32), PACK).reshape(1, POUT)     # (1, 128)

    # --- tile the packed-row axis ---
    tile8 = max(8, (tile_batch // 64) * 8)                    # multiple of 8 packed rows
    if rows8 <= tile8:
        # Single-tile case; if the batch is big enough, split it so both v7x
        # TensorCores get work on the "parallel" axis.
        tb8 = _round_up(pl.cdiv(rows8, 2), 8) if rows8 >= 1024 else rows8
    else:
        tb8 = tile8
    n_tiles = pl.cdiv(rows8, tb8)                             # ragged last block is masked

    x_spec_kwargs = {}
    if n_tiles >= 3:
        x_spec_kwargs = dict(pipeline_mode=pl.Buffered(3))    # keep more DMAs in flight
    x_spec = pl.BlockSpec((tb8, PIN), lambda i: (i, 0), **x_spec_kwargs)

    # VMEM budget: 3x input tile (80->128 lanes) + 2x output tile + (tb8, 256) f32 temp.
    tile_vmem = 4 * tb8 * (3 * 128 + 2 * 128 + 256) + (1 << 20)
    vmem_limit = int(min(100 << 20, max(36 << 20, 2 * tile_vmem)))

    cost = pl.CostEstimate(
        flops=2 * pbatch * (IN0 * HID + HID * OUT),
        bytes_accessed=4 * pbatch * (IN0 + OUT)
        + 4 * (PIN * PHID + PHID * POUT + PHID + POUT),
        transcendentals=0,
    )

    yp = pl.pallas_call(
        simplenet_kernel,
        out_shape=jax.ShapeDtypeStruct((rows8, POUT), jnp.float32),
        grid=(n_tiles,),
        in_specs=[
            x_spec,                                           # X: pipelined over batch tiles
            pl.BlockSpec((PIN, PHID), lambda i: (0, 0)),      # weights/bias: VMEM-resident
            pl.BlockSpec((1, PHID), lambda i: (0, 0)),
            pl.BlockSpec((PHID, POUT), lambda i: (0, 0)),
            pl.BlockSpec((1, POUT), lambda i: (0, 0)),
        ],
        out_specs=pl.BlockSpec((tb8, POUT), lambda i: (i, 0)),
        compiler_params=pltpu.CompilerParams(
            dimension_semantics=("parallel",),                # v7x: shard tiles over 2 TCs
            vmem_limit_bytes=vmem_limit,
        ),
        cost_estimate=cost,
    )(xp, w0p, b0p, w1p, b1p)

    # (rows8, 128) -> (pbatch, 16) is a metadata-only row-major reshape; the slice is a
    # no-op when batch % 8 == 0.
    return yp.reshape(pbatch, OUT)[:batch]


def init_params(key):
    # Deterministic synthetic init, PyTorch-style uniform bounds and PyTorch
    # (out_features, in_features) weight layout.
    k0, k1, k2, k3 = jax.random.split(key, 4)
    bound0 = 1.0 / jnp.sqrt(IN0)
    bound1 = 1.0 / jnp.sqrt(HID)
    w0 = jax.random.uniform(k0, (HID, IN0), jnp.float32, -bound0, bound0)
    b0 = jax.random.uniform(k1, (HID,), jnp.float32, -bound0, bound0)
    w1 = jax.random.uniform(k2, (OUT, HID), jnp.float32, -bound1, bound1)
    b1 = jax.random.uniform(k3, (OUT,), jnp.float32, -bound1, bound1)
    return w0, b0, w1, b1


def _reference(x, w0, b0, w1, b1):
    # Plain-JAX reference matching PyTorch SimpleNet.forward.
    x = x.astype(jnp.float32)
    hi = jax.lax.Precision.HIGHEST
    h = jnp.maximum(jnp.dot(x, w0.T, precision=hi) + b0, 0.0)
    return jnp.dot(h, w1.T, precision=hi) + b1


if __name__ == "__main__":
    key = jax.random.PRNGKey(0)
    kx, kp = jax.random.split(key)
    w0, b0, w1, b1 = init_params(kp)

    # Primary small case: batch not a multiple of 8 exercises the zero-pad tail path.
    batch = 20
    x = jax.random.normal(kx, (batch, IN0), jnp.float32)
    out = jax.block_until_ready(simplenet_forward(x, w0, b0, w1, b1))
    ref = _reference(x, w0, b0, w1, b1)
    assert out.shape == (batch, OUT)
    assert jnp.allclose(out, ref, atol=1e-5, rtol=1e-5), float(jnp.max(jnp.abs(out - ref)))

    # Secondary case: multi-step grid with a ragged last block (Pallas masks OOB writes).
    batch2 = 76
    x2 = jax.random.normal(kx, (batch2, IN0), jnp.float32)
    out2 = jax.block_until_ready(simplenet_forward(x2, w0, b0, w1, b1, tile_batch=64))
    ref2 = _reference(x2, w0, b0, w1, b1)
    assert out2.shape == (batch2, OUT)
    assert jnp.allclose(out2, ref2, atol=1e-5, rtol=1e-5), float(jnp.max(jnp.abs(out2 - ref2)))

    print("KERNEL_OK")
</pallas_src>

<mosaic_0001>
module attributes {stable_mosaic.version = 11 : i64} {
  func.func @simplenet_kernel(%arg0: i32, %arg1: memref<3x80xf32, #tpu.memory_space<vmem>>, %arg2: memref<80x160xf32, #tpu.memory_space<vmem>>, %arg3: memref<1x160xf32, #tpu.memory_space<vmem>>, %arg4: memref<160x128xf32, #tpu.memory_space<vmem>>, %arg5: memref<1x128xf32, #tpu.memory_space<vmem>>, %arg6: memref<3x128xf32, #tpu.memory_space<vmem>>) attributes {dimension_semantics = [#tpu.dimension_semantics<parallel>], iteration_bounds = array<i64: 1>, scalar_prefetch = 0 : i64, scratch_operands = 0 : i64, tpu.core_type = #tpu.core_type<tc>, window_params = [{transform_indices = @transform_0, window_bounds = array<i64: 3, 80>}, {pipeline_mode = #tpu.pipeline_mode<synchronous>, transform_indices = @transform_1, window_bounds = array<i64: 80, 160>}, {pipeline_mode = #tpu.pipeline_mode<synchronous>, transform_indices = @transform_2, window_bounds = array<i64: 1, 160>}, {pipeline_mode = #tpu.pipeline_mode<synchronous>, transform_indices = @transform_3, window_bounds = array<i64: 160, 128>}, {pipeline_mode = #tpu.pipeline_mode<synchronous>, transform_indices = @transform_4, window_bounds = array<i64: 1, 128>}, {transform_indices = @transform_5, window_bounds = array<i64: 3, 128>}]} {
    %c0 = arith.constant 0 : index
    %c0_0 = arith.constant 0 : index
    %0 = vector.load %arg1[%c0, %c0_0] : memref<3x80xf32, #tpu.memory_space<vmem>>, vector<3x80xf32>
    %c0_1 = arith.constant 0 : index
    %c0_2 = arith.constant 0 : index
    %1 = vector.load %arg2[%c0_1, %c0_2] : memref<80x160xf32, #tpu.memory_space<vmem>>, vector<80x160xf32>
    %cst = arith.constant dense<0.000000e+00> : vector<3x160xf32>
    %2 = tpu.matmul %0, %1, %cst {dimension_numbers = #tpu.dot_dimension_numbers<[1], [0], [0], [1], [0, 0, 1, 1], [], []>, precision = #tpu.contract_precision<fp32>} : vector<3x80xf32>, vector<80x160xf32>, vector<3x160xf32> -> vector<3x160xf32>
    %c0_3 = arith.constant 0 : index
    %c0_4 = arith.constant 0 : index
    %3 = vector.load %arg3[%c0_3, %c0_4] : memref<1x160xf32, #tpu.memory_space<vmem>>, vector<1x160xf32>
    %4 = vector.broadcast %3 : vector<1x160xf32> to vector<3x160xf32>
    %5 = arith.addf %2, %4 : vector<3x160xf32>
    %cst_5 = arith.constant 0.000000e+00 : f32
    %6 = vector.broadcast %cst_5 : f32 to vector<3x160xf32>
    %7 = arith.maximumf %5, %6 : vector<3x160xf32>
    %c0_6 = arith.constant 0 : index
    %c0_7 = arith.constant 0 : index
    %8 = vector.load %arg4[%c0_6, %c0_7] : memref<160x128xf32, #tpu.memory_space<vmem>>, vector<160x128xf32>
    %cst_8 = arith.constant dense<0.000000e+00> : vector<3x128xf32>
    %9 = tpu.matmul %7, %8, %cst_8 {dimension_numbers = #tpu.dot_dimension_numbers<[1], [0], [0], [1], [0, 0, 1, 1], [], []>, precision = #tpu.contract_precision<fp32>} : vector<3x160xf32>, vector<160x128xf32>, vector<3x128xf32> -> vector<3x128xf32>
    %c0_9 = arith.constant 0 : index
    %c0_10 = arith.constant 0 : index
    %10 = vector.load %arg5[%c0_9, %c0_10] : memref<1x128xf32, #tpu.memory_space<vmem>>, vector<1x128xf32>
    %11 = vector.broadcast %10 : vector<1x128xf32> to vector<3x128xf32>
    %12 = arith.addf %9, %11 : vector<3x128xf32>
    %c0_11 = arith.constant 0 : index
    %c0_12 = arith.constant 0 : index
    %13 = vector.load %arg6[%c0_11, %c0_12] : memref<3x128xf32, #tpu.memory_space<vmem>>, vector<3x128xf32>
    tpu.vector_store %arg6[%c0_11, %c0_12], %12 {strides = array<i32>} : memref<3x128xf32, #tpu.memory_space<vmem>>, vector<3x128xf32>,
    return
  }
  func.func @transform_0(%arg0: i32) -> (i32, i32) {
    %c0_i32 = arith.constant 0 : i32
    %c0_i32_0 = arith.constant 0 : i32
    return %arg0, %c0_i32 : i32, i32
  }
  func.func @transform_1(%arg0: i32) -> (i32, i32) {
    %c0_i32 = arith.constant 0 : i32
    %c0_i32_0 = arith.constant 0 : i32
    %c0_i32_1 = arith.constant 0 : i32
    return %c0_i32, %c0_i32_0 : i32, i32
  }
  func.func @transform_2(%arg0: i32) -> (i32, i32) {
    %c0_i32 = arith.constant 0 : i32
    %c0_i32_0 = arith.constant 0 : i32
    %c0_i32_1 = arith.constant 0 : i32
    return %c0_i32, %c0_i32_0 : i32, i32
  }
  func.func @transform_3(%arg0: i32) -> (i32, i32) {
    %c0_i32 = arith.constant 0 : i32
    %c0_i32_0 = arith.constant 0 : i32
    %c0_i32_1 = arith.constant 0 : i32
    return %c0_i32, %c0_i32_0 : i32, i32
  }
  func.func @transform_4(%arg0: i32) -> (i32, i32) {
    %c0_i32 = arith.constant 0 : i32
    %c0_i32_0 = arith.constant 0 : i32
    %c0_i32_1 = arith.constant 0 : i32
    return %c0_i32, %c0_i32_0 : i32, i32
  }
  func.func @transform_5(%arg0: i32) -> (i32, i32) {
    %c0_i32 = arith.constant 0 : i32
    %c0_i32_0 = arith.constant 0 : i32
    return %arg0, %c0_i32 : i32, i32
  }
}

</mosaic_0001>

<llo_original>
// kernel: tpu_custom_call.1
$region0: #{tpu_custom_call.1}
  #allocation0 [shape = 'u32[]', space=smem, size = 0x4, offset = 0x4, fixed_abs, tag = 'smem constant byte address 0x4 - core index']
  #allocation1 [shape = 'u32[144,128]{1,0:T(1,128)}', space=vmem, size = 0x12000, scoped, tag = 'internal scratch']
  %s0 = inlined_call_operand.hbm [shape: f32[3,80], index: 0, kind: input, shape index: {}]
  %s1 = inlined_call_operand.hbm [shape: f32[80,160], index: 1, kind: input, shape index: {}]
  %s2 = inlined_call_operand.vmem [shape: f32[1,160], index: 2, kind: input, shape index: {}]
  %s3 = inlined_call_operand.hbm [shape: f32[160,128], index: 3, kind: input, shape index: {}]
  %s4 = inlined_call_operand.vmem [shape: f32[1,128], index: 4, kind: input, shape index: {}]
  %s5 = inlined_call_operand.hbm [shape: f32[3,128], index: 5, kind: output, shape index: {}]
  %s6 = sld [smem:[#allocation0]]
  $region42: #{tpu_custom_call.1} parent=0
    _
  %s8 = ssub.s32 1, %s6
  %s9 = scalar_select 0, %s8, %s6
  $region1: #{tpu_custom_call.1} parent=0
    #allocation2 [shape = 'u8[2048]{0}', space=vmem, size = 0x800, scoped, tag = 'input window, operand 0, single buffered']
    #allocation3 [shape = 's32[1]{0}', space=sflag, size = 0x4, scoped, tag = 'scoped memory for tpu_custom_call.1']
    #allocation4 [shape = 's32[1]{0}', space=sflag, size = 0x4, scoped, tag = 'scoped memory for tpu_custom_call.1']
    #allocation5 [shape = 'u8[81920]{0}', space=vmem, size = 0x14000, scoped, tag = 'input window, operand 1, single buffered']
    #allocation6 [shape = 's32[1]{0}', space=sflag, size = 0x4, scoped, tag = 'scoped memory for tpu_custom_call.1']
    #allocation7 [shape = 'u8[81920]{0}', space=vmem, size = 0x14000, scoped, tag = 'input window, operand 3, single buffered']
    #allocation8 [shape = 'u8[2048]{0}', space=vmem, size = 0x800, scoped, tag = 'output window, operand 0, single buffered']
    %10 = vsyncpa [#allocation3], 0
    %11 = vsyncpa [#allocation6], 0
    %12 = vsyncpa [#allocation4], 0
    // Predicated region
    $region2: #{tpu_custom_call.1} parent=1 // pred_check
      _
    $region3: #{tpu_custom_call.1} parent=1 // pred_check_branch
      %14 = sbr.rel (0) target = $region5
    $region4: #{tpu_custom_call.1} parent=1 // pred_region
      %s16 = ssub.s32 64, 64
      %17 = vsyncadd [#allocation3], %s16
      %s19 = sshll.u32 [#allocation2], 4
      %s20 = int_to_ptr.vmem [resolvable:$true] %s19
      %22 = dma.hbm_to_vmem [thread:$0]  %s0, 64, %s20, [#allocation3]
    $region5: #{tpu_custom_call.1} parent=1 // pred_fallthru
      _
    // Predicated region
    $region6: #{tpu_custom_call.1} parent=1 // pred_check
      _
    $region7: #{tpu_custom_call.1} parent=1 // pred_check_branch
      %24 = sbr.rel (0) target = $region9
    $region8: #{tpu_custom_call.1} parent=1 // pred_region
      %s26 = ssub.s32 2560, 2560
      %27 = vsyncadd [#allocation6], %s26
      %s28 = sshll.u32 [#allocation5], 4
      %s29 = int_to_ptr.vmem [resolvable:$true] %s28
      %34 = dma.hbm_to_vmem [thread:$0]  %s1, 2560, %s29, [#allocation6], 256, 256, 16
    $region9: #{tpu_custom_call.1} parent=1 // pred_fallthru
      _
    // Predicated region
    $region10: #{tpu_custom_call.1} parent=1 // pred_check
      _
    $region11: #{tpu_custom_call.1} parent=1 // pred_check_branch
      %36 = sbr.rel (0) target = $region13
    $region12: #{tpu_custom_call.1} parent=1 // pred_region
      _
    $region13: #{tpu_custom_call.1} parent=1 // pred_fallthru
      _
    // Predicated region
    $region14: #{tpu_custom_call.1} parent=1 // pred_check
      _
    $region15: #{tpu_custom_call.1} parent=1 // pred_check_branch
      %38 = sbr.rel (0) target = $region17
    $region16: #{tpu_custom_call.1} parent=1 // pred_region
      %s40 = ssub.s32 2560, 2560
      %41 = vsyncadd [#allocation6], %s40
      %s42 = sshll.u32 [#allocation7], 4
      %s43 = int_to_ptr.vmem [resolvable:$true] %s42
      %48 = dma.hbm_to_vmem [thread:$0]  %s3, 2560, %s43, [#allocation6], 128, 128, 8
    $region17: #{tpu_custom_call.1} parent=1 // pred_fallthru
      _
    // Predicated region
    $region18: #{tpu_custom_call.1} parent=1 // pred_check
      _
    $region19: #{tpu_custom_call.1} parent=1 // pred_check_branch
      %50 = sbr.rel (0) target = $region21
    $region20: #{tpu_custom_call.1} parent=1 // pred_region
      _
    $region21: #{tpu_custom_call.1} parent=1 // pred_fallthru
      _
    // Predicated region
    $region22: #{tpu_custom_call.1} parent=1 // pred_check
      _
    $region23: #{tpu_custom_call.1} parent=1 // pred_check_branch
      %52 = sbr.rel (0) target = $region25
    $region24: #{tpu_custom_call.1} parent=1 // pred_region
      %53 = dma.done [#allocation3], 64
    $region25: #{tpu_custom_call.1} parent=1 // pred_fallthru
      _
    // Predicated region
    $region26: #{tpu_custom_call.1} parent=1 // pred_check
      _
    $region27: #{tpu_custom_call.1} parent=1 // pred_check_branch
      %55 = sbr.rel (0) target = $region29
    $region28: #{tpu_custom_call.1} parent=1 // pred_region
      %56 = dma.done [#allocation6], 2560
    $region29: #{tpu_custom_call.1} parent=1 // pred_fallthru
      _
    // Predicated region
    $region30: #{tpu_custom_call.1} parent=1 // pred_check
      _
    $region31: #{tpu_custom_call.1} parent=1 // pred_check_branch
      %58 = sbr.rel (0) target = $region33
    $region32: #{tpu_custom_call.1} parent=1 // pred_region
      %59 = dma.done [#allocation6], 2560
    $region33: #{tpu_custom_call.1} parent=1 // pred_fallthru
      _
    %v60 = vld [vmem:[#allocation2] sm:$0x7]
    %v61 = vld [vmem:[#allocation5] sm:$0xff]
    %v62 = vld [vmem:[#allocation5 + $0x8] sm:$0xff]
    %v63 = vld [vmem:[#allocation5 + $0x10] sm:$0xff]
    %v64 = vld [vmem:[#allocation5 + $0x18] sm:$0xff]
    %v65 = vld [vmem:[#allocation5 + $0x20] sm:$0xff]
    %v66 = vld [vmem:[#allocation5 + $0x28] sm:$0xff]
    %v67 = vld [vmem:[#allocation5 + $0x30] sm:$0xff]
    %v68 = vld [vmem:[#allocation5 + $0x38] sm:$0xff]
    %v69 = vld [vmem:[#allocation5 + $0x40] sm:$0xff]
    %v70 = vld [vmem:[#allocation5 + $0x48] sm:$0xff]
    %v71 = vld [vmem:[#allocation5 + $0x50] sm:$0xff]
    %v72 = vld [vmem:[#allocation5 + $0x58] sm:$0xff]
    %v73 = vld [vmem:[#allocation5 + $0x60] sm:$0xff]
    %v74 = vld [vmem:[#allocation5 + $0x68] sm:$0xff]
    %v75 = vld [vmem:[#allocation5 + $0x70] sm:$0xff]
    %v76 = vld [vmem:[#allocation5 + $0x78] sm:$0xff]
    %v77 = vld [vmem:[#allocation5 + $0x80] sm:$0xff]
    %v78 = vld [vmem:[#allocation5 + $0x88] sm:$0xff]
    %v79 = vld [vmem:[#allocation5 + $0x90] sm:$0xff]
    %v80 = vld [vmem:[#allocation5 + $0x98] sm:$0xff]
    %v81 = vld [vmem:[%s2] sm:$0x3]
    %v83 = vlaneseq
    %v84 = vshrl.u32 %v83, 7
    %v85 = vsub.s32 0, %v84
    %v86 = vrot.slane %v81, %v85
    %v87 = vlaneseq
    %v88 = vshrl.u32 %v87, 7
    %v89 = vsub.s32 1, %v88
    %v90 = vrot.slane %v81, %v89
    %vm93 = vcmask 654336
    %v95 = vsel %vm93, %v60, 0
    %97 = vmatprep.subr.mxu0 0.0
    %98 = vmatpush1.msra.mxu0 0.0
    %99 = vmatprep.subr.mxu0 0.0
    %100 = vmatpush1.msra.mxu0 0.0
    %101 = vmatprep.subr.mxu0 0.0
    %102 = vmatpush1.msra.mxu0 0.0
    %103 = vmatprep.subr.mxu0 0.0
    %104 = vmatpush1.msra.mxu0 0.0
    %105 = vmatprep.subr.mxu0 0.0
    %106 = vmatpush1.msra.mxu0 0.0
    %107 = vmatprep.subr.mxu0 0.0
    %108 = vmatpush1.msra.mxu0 0.0
    %v109 = vand.u32 %v80, 4294901760
    %110 = vmatprep.subr.mxu0 %v109
    %v111 = vand.u32 %v79, 4294901760
    %112 = vmatpush1.msra.mxu0 %v111
    %v113 = vand.u32 %v78, 4294901760
    %114 = vmatprep.subr.mxu0 %v113
    %v115 = vand.u32 %v77, 4294901760
    %116 = vmatpush1.msra.mxu0 %v115
    %v117 = vand.u32 %v76, 4294901760
    %118 = vmatprep.subr.mxu0 %v117
    %v119 = vand.u32 %v75, 4294901760
    %120 = vmatpush1.msra.mxu0 %v119
    %v121 = vand.u32 %v74, 4294901760
    %122 = vmatprep.subr.mxu0 %v121
    %v123 = vand.u32 %v73, 4294901760
    %124 = vmatpush1.msra.mxu0 %v123
    %v125 = vand.u32 %v72, 4294901760
    %126 = vmatprep.subr.mxu0 %v125
    %v127 = vand.u32 %v71, 4294901760
    %128 = vmatpush1.msra.mxu0 %v127
    %v129 = vand.u32 %v70, 4294901760
    %130 = vmatprep.subr.mxu0 %v129
    %v131 = vand.u32 %v69, 4294901760
    %132 = vmatpush1.msra.mxu0 %v131
    %v133 = vand.u32 %v68, 4294901760
    %134 = vmatprep.subr.mxu0 %v133
    %v135 = vand.u32 %v67, 4294901760
    %136 = vmatpush1.msra.mxu0 %v135
    %v137 = vand.u32 %v66, 4294901760
    %138 = vmatprep.subr.mxu0 %v137
    %v139 = vand.u32 %v65, 4294901760
    %140 = vmatpush1.msra.mxu0 %v139
    %v141 = vand.u32 %v64, 4294901760
    %142 = vmatprep.subr.mxu0 %v141
    %v143 = vand.u32 %v63, 4294901760
    %144 = vmatpush1.msra.mxu0 %v143
    %v145 = vand.u32 %v62, 4294901760
    %146 = vmatprep.subr.mxu0 %v145
    %v147 = vand.u32 %v61, 4294901760
    %148 = vmatpush1.msra.mxu0 %v147
    %149 = vmatprep.subr.mxu0 0.0
    %150 = vmatpush2.msra.mxu0 0.0
    %151 = vmatprep.subr.mxu0 0.0
    %152 = vmatpush2.msra.mxu0 0.0
    %153 = vmatprep.subr.mxu0 0.0
    %154 = vmatpush2.msra.mxu0 0.0
    %155 = vmatprep.subr.mxu0 0.0
    %156 = vmatpush2.msra.mxu0 0.0
    %157 = vmatprep.subr.mxu0 0.0
    %158 = vmatpush2.msra.mxu0 0.0
    %159 = vmatprep.subr.mxu0 0.0
    %160 = vmatpush2.msra.mxu0 0.0
    %161 = vmatprep.subr.mxu0 0.0
    %162 = vmatpush2.msra.mxu0 0.0
    %163 = vmatprep.subr.mxu0 0.0
    %164 = vmatpush2.msra.mxu0 0.0
    %165 = vmatprep.subr.mxu0 0.0
    %166 = vmatpush2.msra.mxu0 0.0
    %167 = vmatprep.subr.mxu0 0.0
    %168 = vmatpush2.msra.mxu0 0.0
    %169 = vmatprep.subr.mxu0 0.0
    %170 = vmatpush2.msra.mxu0 0.0
    %171 = vmatprep.subr.mxu0 0.0
    %172 = vmatpush2.msra.mxu0 0.0
    %173 = vmatprep.subr.mxu0 0.0
    %174 = vmatpush2.msra.mxu0 0.0
    %175 = vmatprep.subr.mxu0 0.0
    %176 = vmatpush2.msra.mxu0 0.0
    %177 = vmatprep.subr.mxu0 0.0
    %178 = vmatpush2.msra.mxu0 0.0
    %179 = vmatprep.subr.mxu0 0.0
    %180 = vmatpush2.msra.mxu0 0.0
    %181 = vmatprep.mubr.f32.mxu0 0.0
    %v182 = vand.u32 %v95, 4294901760
    %v183 = vsub.f32 %v95, %v182
    %v184 = vand.u32 %v183, 4294901760
    %v185 = vsub.f32 %v183, %v184
    %v186 = vand.u32 %v185, 4294901760
    %187 = vmatmul.mubr.f32.gmra.mxu0 %v186
    %v188 = vpop.f32.mrf.mxu0
    %v189 = vadd.f32 %v86, %v188
    %v190 = vpop.f32.mrf.mxu0
    %v191 = vadd.f32 %v90, %v190
    %192 = vdwg.mxu0
    %193 = vmatprep.subr.mxu0 0.0
    %194 = vmatpush1.msra.mxu0 0.0
    %195 = vmatprep.subr.mxu0 0.0
    %196 = vmatpush1.msra.mxu0 0.0
    %197 = vmatprep.subr.mxu0 0.0
    %198 = vmatpush1.msra.mxu0 0.0
    %199 = vmatprep.subr.mxu0 0.0
    %200 = vmatpush1.msra.mxu0 0.0
    %201 = vmatprep.subr.mxu0 0.0
    %202 = vmatpush1.msra.mxu0 0.0
    %203 = vmatprep.subr.mxu0 0.0
    %204 = vmatpush1.msra.mxu0 0.0
    %v205 = vand.u32 %v80, 4294901760
    %v206 = vsub.f32 %v80, %v205
    %v207 = vand.u32 %v206, 4294901760
    %v208 = vsub.f32 %v206, %v207
    %v209 = vand.u32 %v208, 4294901760
    %210 = vmatprep.subr.mxu0 %v209
    %v211 = vand.u32 %v79, 4294901760
    %v212 = vsub.f32 %v79, %v211
    %v213 = vand.u32 %v212, 4294901760
    %v214 = vsub.f32 %v212, %v213
    %v215 = vand.u32 %v214, 4294901760
    %216 = vmatpush1.msra.mxu0 %v215
    %v217 = vand.u32 %v78, 4294901760
    %v218 = vsub.f32 %v78, %v217
    %v219 = vand.u32 %v218, 4294901760
    %v220 = vsub.f32 %v218, %v219
    %v221 = vand.u32 %v220, 4294901760
    %222 = vmatprep.subr.mxu0 %v221
    %v223 = vand.u32 %v77, 4294901760
    %v224 = vsub.f32 %v77, %v223
    %v225 = vand.u32 %v224, 4294901760
    %v226 = vsub.f32 %v224, %v225
    %v227 = vand.u32 %v226, 4294901760
    %228 = vmatpush1.msra.mxu0 %v227
    %v229 = vand.u32 %v76, 4294901760
    %v230 = vsub.f32 %v76, %v229
    %v231 = vand.u32 %v230, 4294901760
    %v232 = vsub.f32 %v230, %v231
    %v233 = vand.u32 %v232, 4294901760
    %234 = vmatprep.subr.mxu0 %v233
    %v235 = vand.u32 %v75, 4294901760
    %v236 = vsub.f32 %v75, %v235
    %v237 = vand.u32 %v236, 4294901760
    %v238 = vsub.f32 %v236, %v237
    %v239 = vand.u32 %v238, 4294901760
    %240 = vmatpush1.msra.mxu0 %v239
    %v241 = vand.u32 %v74, 4294901760
    %v242 = vsub.f32 %v74, %v241
    %v243 = vand.u32 %v242, 4294901760
    %v244 = vsub.f32 %v242, %v243
    %v245 = vand.u32 %v244, 4294901760
    %246 = vmatprep.subr.mxu0 %v245
    %v247 = vand.u32 %v73, 4294901760
    %v248 = vsub.f32 %v73, %v247
    %v249 = vand.u32 %v248, 4294901760
    %v250 = vsub.f32 %v248, %v249
    %v251 = vand.u32 %v250, 4294901760
    %252 = vmatpush1.msra.mxu0 %v251
    %v253 = vand.u32 %v72, 4294901760
    %v254 = vsub.f32 %v72, %v253
    %v255 = vand.u32 %v254, 4294901760
    %v256 = vsub.f32 %v254, %v255
    %v257 = vand.u32 %v256, 4294901760
    %258 = vmatprep.subr.mxu0 %v257
    %v259 = vand.u32 %v71, 4294901760
    %v260 = vsub.f32 %v71, %v259
    %v261 = vand.u32 %v260, 4294901760
    %v262 = vsub.f32 %v260, %v261
    %v263 = vand.u32 %v262, 4294901760
    %264 = vmatpush1.msra.mxu0 %v263
    %v265 = vand.u32 %v70, 4294901760
    %v266 = vsub.f32 %v70, %v265
    %v267 = vand.u32 %v266, 4294901760
    %v268 = vsub.f32 %v266, %v267
    %v269 = vand.u32 %v268, 4294901760
    %270 = vmatprep.subr.mxu0 %v269
    %v271 = vand.u32 %v69, 4294901760
    %v272 = vsub.f32 %v69, %v271
    %v273 = vand.u32 %v272, 4294901760
    %v274 = vsub.f32 %v272, %v273
    %v275 = vand.u32 %v274, 4294901760
    %276 = vmatpush1.msra.mxu0 %v275
    %v277 = vand.u32 %v68, 4294901760
    %v278 = vsub.f32 %v68, %v277
    %v279 = vand.u32 %v278, 4294901760
    %v280 = vsub.f32 %v278, %v279
    %v281 = vand.u32 %v280, 4294901760
    %282 = vmatprep.subr.mxu0 %v281
    %v283 = vand.u32 %v67, 4294901760
    %v284 = vsub.f32 %v67, %v283
    %v285 = vand.u32 %v284, 4294901760
    %v286 = vsub.f32 %v284, %v285
    %v287 = vand.u32 %v286, 4294901760
    %288 = vmatpush1.msra.mxu0 %v287
    %v289 = vand.u32 %v66, 4294901760
    %v290 = vsub.f32 %v66, %v289
    %v291 = vand.u32 %v290, 4294901760
    %v292 = vsub.f32 %v290, %v291
    %v293 = vand.u32 %v292, 4294901760
    %294 = vmatprep.subr.mxu0 %v293
    %v295 = vand.u32 %v65, 4294901760
    %v296 = vsub.f32 %v65, %v295
    %v297 = vand.u32 %v296, 4294901760
    %v298 = vsub.f32 %v296, %v297
    %v299 = vand.u32 %v298, 4294901760
    %300 = vmatpush1.msra.mxu0 %v299
    %v301 = vand.u32 %v64, 4294901760
    %v302 = vsub.f32 %v64, %v301
    %v303 = vand.u32 %v302, 4294901760
    %v304 = vsub.f32 %v302, %v303
    %v305 = vand.u32 %v304, 4294901760
    %306 = vmatprep.subr.mxu0 %v305
    %v307 = vand.u32 %v63, 4294901760
    %v308 = vsub.f32 %v63, %v307
    %v309 = vand.u32 %v308, 4294901760
    %v310 = vsub.f32 %v308, %v309
    %v311 = vand.u32 %v310, 4294901760
    %312 = vmatpush1.msra.mxu0 %v311
    %v313 = vand.u32 %v62, 4294901760
    %v314 = vsub.f32 %v62, %v313
    %v315 = vand.u32 %v314, 4294901760
    %v316 = vsub.f32 %v314, %v315
    %v317 = vand.u32 %v316, 4294901760
    %318 = vmatprep.subr.mxu0 %v317
    %v319 = vand.u32 %v61, 4294901760
    %v320 = vsub.f32 %v61, %v319
    %v321 = vand.u32 %v320, 4294901760
    %v322 = vsub.f32 %v320, %v321
    %v323 = vand.u32 %v322, 4294901760
    %324 = vmatpush1.msra.mxu0 %v323
    %325 = vmatprep.subr.mxu0 0.0
    %326 = vmatpush2.msra.mxu0 0.0
    %327 = vmatprep.subr.mxu0 0.0
    %328 = vmatpush2.msra.mxu0 0.0
    %329 = vmatprep.subr.mxu0 0.0
    %330 = vmatpush2.msra.mxu0 0.0
    %331 = vmatprep.subr.mxu0 0.0
    %332 = vmatpush2.msra.mxu0 0.0
    %333 = vmatprep.subr.mxu0 0.0
    %334 = vmatpush2.msra.mxu0 0.0
    %335 = vmatprep.subr.mxu0 0.0
    %336 = vmatpush2.msra.mxu0 0.0
    %337 = vmatprep.subr.mxu0 0.0
    %338 = vmatpush2.msra.mxu0 0.0
    %339 = vmatprep.subr.mxu0 0.0
    %340 = vmatpush2.msra.mxu0 0.0
    %341 = vmatprep.subr.mxu0 0.0
    %342 = vmatpush2.msra.mxu0 0.0
    %343 = vmatprep.subr.mxu0 0.0
    %344 = vmatpush2.msra.mxu0 0.0
    %345 = vmatprep.subr.mxu0 0.0
    %346 = vmatpush2.msra.mxu0 0.0
    %347 = vmatprep.subr.mxu0 0.0
    %348 = vmatpush2.msra.mxu0 0.0
    %349 = vmatprep.subr.mxu0 0.0
    %350 = vmatpush2.msra.mxu0 0.0
    %351 = vmatprep.subr.mxu0 0.0
    %352 = vmatpush2.msra.mxu0 0.0
    %353 = vmatprep.subr.mxu0 0.0
    %354 = vmatpush2.msra.mxu0 0.0
    %355 = vmatprep.subr.mxu0 0.0
    %356 = vmatpush2.msra.mxu0 0.0
    %357 = vmatprep.mubr.f32.mxu0 0.0
    %v358 = vand.u32 %v95, 4294901760
    %359 = vmatmul.mubr.f32.gmra.mxu0 %v358
    %v360 = vpop.f32.mrf.mxu0
    %v361 = vadd.f32 %v189, %v360
    %v362 = vpop.f32.mrf.mxu0
    %v363 = vadd.f32 %v191, %v362
    %364 = vdwg.mxu0
    %365 = vmatprep.subr.mxu0 0.0
    %366 = vmatpush1.msra.mxu0 0.0
    %367 = vmatprep.subr.mxu0 0.0
    %368 = vmatpush1.msra.mxu0 0.0
    %369 = vmatprep.subr.mxu0 0.0
    %370 = vmatpush1.msra.mxu0 0.0
    %371 = vmatprep.subr.mxu0 0.0
    %372 = vmatpush1.msra.mxu0 0.0
    %373 = vmatprep.subr.mxu0 0.0
    %374 = vmatpush1.msra.mxu0 0.0
    %375 = vmatprep.subr.mxu0 0.0
    %376 = vmatpush1.msra.mxu0 0.0
    %v377 = vand.u32 %v80, 4294901760
    %v378 = vsub.f32 %v80, %v377
    %379 = vmatprep.subr.mxu0 %v378
    %v380 = vand.u32 %v79, 4294901760
    %v381 = vsub.f32 %v79, %v380
    %382 = vmatpush1.msra.mxu0 %v381
    %v383 = vand.u32 %v78, 4294901760
    %v384 = vsub.f32 %v78, %v383
    %385 = vmatprep.subr.mxu0 %v384
    %v386 = vand.u32 %v77, 4294901760
    %v387 = vsub.f32 %v77, %v386
    %388 = vmatpush1.msra.mxu0 %v387
    %v389 = vand.u32 %v76, 4294901760
    %v390 = vsub.f32 %v76, %v389
    %391 = vmatprep.subr.mxu0 %v390
    %v392 = vand.u32 %v75, 4294901760
    %v393 = vsub.f32 %v75, %v392
    %394 = vmatpush1.msra.mxu0 %v393
    %v395 = vand.u32 %v74, 4294901760
    %v396 = vsub.f32 %v74, %v395
    %397 = vmatprep.subr.mxu0 %v396
    %v398 = vand.u32 %v73, 4294901760
    %v399 = vsub.f32 %v73, %v398
    %400 = vmatpush1.msra.mxu0 %v399
    %v401 = vand.u32 %v72, 4294901760
    %v402 = vsub.f32 %v72, %v401
    %403 = vmatprep.subr.mxu0 %v402
    %v404 = vand.u32 %v71, 4294901760
    %v405 = vsub.f32 %v71, %v404
    %406 = vmatpush1.msra.mxu0 %v405
    %v407 = vand.u32 %v70, 4294901760
    %v408 = vsub.f32 %v70, %v407
    %409 = vmatprep.subr.mxu0 %v408
    %v410 = vand.u32 %v69, 4294901760
    %v411 = vsub.f32 %v69, %v410
    %412 = vmatpush1.msra.mxu0 %v411
    %v413 = vand.u32 %v68, 4294901760
    %v414 = vsub.f32 %v68, %v413
    %415 = vmatprep.subr.mxu0 %v414
    %v416 = vand.u32 %v67, 4294901760
    %v417 = vsub.f32 %v67, %v416
    %418 = vmatpush1.msra.mxu0 %v417
    %v419 = vand.u32 %v66, 4294901760
    %v420 = vsub.f32 %v66, %v419
    %421 = vmatprep.subr.mxu0 %v420
    %v422 = vand.u32 %v65, 4294901760
    %v423 = vsub.f32 %v65, %v422
    %424 = vmatpush1.msra.mxu0 %v423
    %v425 = vand.u32 %v64, 4294901760
    %v426 = vsub.f32 %v64, %v425
    %427 = vmatprep.subr.mxu0 %v426
    %v428 = vand.u32 %v63, 4294901760
    %v429 = vsub.f32 %v63, %v428
    %430 = vmatpush1.msra.mxu0 %v429
    %v431 = vand.u32 %v62, 4294901760
    %v432 = vsub.f32 %v62, %v431
    %433 = vmatprep.subr.mxu0 %v432
    %v434 = vand.u32 %v61, 4294901760
    %v435 = vsub.f32 %v61, %v434
    %436 = vmatpush1.msra.mxu0 %v435
    %437 = vmatprep.subr.mxu0 0.0
    %438 = vmatpush2.msra.mxu0 0.0
    %439 = vmatprep.subr.mxu0 0.0
    %440 = vmatpush2.msra.mxu0 0.0
    %441 = vmatprep.subr.mxu0 0.0
    %442 = vmatpush2.msra.mxu0 0.0
    %443 = vmatprep.subr.mxu0 0.0
    %444 = vmatpush2.msra.mxu0 0.0
    %445 = vmatprep.subr.mxu0 0.0
    %446 = vmatpush2.msra.mxu0 0.0
    %447 = vmatprep.subr.mxu0 0.0
    %448 = vmatpush2.msra.mxu0 0.0
    %449 = vmatprep.subr.mxu0 0.0
    %450 = vmatpush2.msra.mxu0 0.0
    %451 = vmatprep.subr.mxu0 0.0
    %452 = vmatpush2.msra.mxu0 0.0
    %453 = vmatprep.subr.mxu0 0.0
    %454 = vmatpush2.msra.mxu0 0.0
    %455 = vmatprep.subr.mxu0 0.0
    %456 = vmatpush2.msra.mxu0 0.0
    %457 = vmatprep.subr.mxu0 0.0
    %458 = vmatpush2.msra.mxu0 0.0
    %459 = vmatprep.subr.mxu0 0.0
    %460 = vmatpush2.msra.mxu0 0.0
    %461 = vmatprep.subr.mxu0 0.0
    %462 = vmatpush2.msra.mxu0 0.0
    %463 = vmatprep.subr.mxu0 0.0
    %464 = vmatpush2.msra.mxu0 0.0
    %465 = vmatprep.subr.mxu0 0.0
    %466 = vmatpush2.msra.mxu0 0.0
    %467 = vmatprep.subr.mxu0 0.0
    %468 = vmatpush2.msra.mxu0 0.0
    %469 = vmatprep.mubr.f32.mxu0 0.0
    %v470 = vand.u32 %v95, 4294901760
    %v471 = vsub.f32 %v95, %v470
    %472 = vmatmul.mubr.f32.gmra.mxu0 %v471
    %v473 = vpop.f32.mrf.mxu0
    %v474 = vadd.f32 %v361, %v473
    %v475 = vpop.f32.mrf.mxu0
    %v476 = vadd.f32 %v363, %v475
    %477 = vdwg.mxu0
    %478 = vmatprep.subr.mxu0 0.0
    %479 = vmatpush1.msra.mxu0 0.0
    %480 = vmatprep.subr.mxu0 0.0
    %481 = vmatpush1.msra.mxu0 0.0
    %482 = vmatprep.subr.mxu0 0.0
    %483 = vmatpush1.msra.mxu0 0.0
    %484 = vmatprep.subr.mxu0 0.0
    %485 = vmatpush1.msra.mxu0 0.0
    %486 = vmatprep.subr.mxu0 0.0
    %487 = vmatpush1.msra.mxu0 0.0
    %488 = vmatprep.subr.mxu0 0.0
    %489 = vmatpush1.msra.mxu0 0.0
    %v490 = vand.u32 %v80, 4294901760
    %491 = vmatprep.subr.mxu0 %v490
    %v492 = vand.u32 %v79, 4294901760
    %493 = vmatpush1.msra.mxu0 %v492
    %v494 = vand.u32 %v78, 4294901760
    %495 = vmatprep.subr.mxu0 %v494
    %v496 = vand.u32 %v77, 4294901760
    %497 = vmatpush1.msra.mxu0 %v496
    %v498 = vand.u32 %v76, 4294901760
    %499 = vmatprep.subr.mxu0 %v498
    %v500 = vand.u32 %v75, 4294901760
    %501 = vmatpush1.msra.mxu0 %v500
    %v502 = vand.u32 %v74, 4294901760
    %503 = vmatprep.subr.mxu0 %v502
    %v504 = vand.u32 %v73, 4294901760
    %505 = vmatpush1.msra.mxu0 %v504
    %v506 = vand.u32 %v72, 4294901760
    %507 = vmatprep.subr.mxu0 %v506
    %v508 = vand.u32 %v71, 4294901760
    %509 = vmatpush1.msra.mxu0 %v508
    %v510 = vand.u32 %v70, 4294901760
    %511 = vmatprep.subr.mxu0 %v510
    %v512 = vand.u32 %v69, 4294901760
    %513 = vmatpush1.msra.mxu0 %v512
    %v514 = vand.u32 %v68, 4294901760
    %515 = vmatprep.subr.mxu0 %v514
    %v516 = vand.u32 %v67, 4294901760
    %517 = vmatpush1.msra.mxu0 %v516
    %v518 = vand.u32 %v66, 4294901760
    %519 = vmatprep.subr.mxu0 %v518
    %v520 = vand.u32 %v65, 4294901760
    %521 = vmatpush1.msra.mxu0 %v520
    %v522 = vand.u32 %v64, 4294901760
    %523 = vmatprep.subr.mxu0 %v522
    %v524 = vand.u32 %v63, 4294901760
    %525 = vmatpush1.msra.mxu0 %v524
    %v526 = vand.u32 %v62, 4294901760
    %527 = vmatprep.subr.mxu0 %v526
    %v528 = vand.u32 %v61, 4294901760
    %529 = vmatpush1.msra.mxu0 %v528
    %530 = vmatprep.subr.mxu0 0.0
    %531 = vmatpush2.msra.mxu0 0.0
    %532 = vmatprep.subr.mxu0 0.0
    %533 = vmatpush2.msra.mxu0 0.0
    %534 = vmatprep.subr.mxu0 0.0
    %535 = vmatpush2.msra.mxu0 0.0
    %536 = vmatprep.subr.mxu0 0.0
    %537 = vmatpush2.msra.mxu0 0.0
    %538 = vmatprep.subr.mxu0 0.0
    %539 = vmatpush2.msra.mxu0 0.0
    %540 = vmatprep.subr.mxu0 0.0
    %541 = vmatpush2.msra.mxu0 0.0
    %542 = vmatprep.subr.mxu0 0.0
    %543 = vmatpush2.msra.mxu0 0.0
    %544 = vmatprep.subr.mxu0 0.0
    %545 = vmatpush2.msra.mxu0 0.0
    %546 = vmatprep.subr.mxu0 0.0
    %547 = vmatpush2.msra.mxu0 0.0
    %548 = vmatprep.subr.mxu0 0.0
    %549 = vmatpush2.msra.mxu0 0.0
    %550 = vmatprep.subr.mxu0 0.0
    %551 = vmatpush2.msra.mxu0 0.0
    %552 = vmatprep.subr.mxu0 0.0
    %553 = vmatpush2.msra.mxu0 0.0
    %554 = vmatprep.subr.mxu0 0.0
    %555 = vmatpush2.msra.mxu0 0.0
    %556 = vmatprep.subr.mxu0 0.0
    %557 = vmatpush2.msra.mxu0 0.0
    %558 = vmatprep.subr.mxu0 0.0
    %559 = vmatpush2.msra.mxu0 0.0
    %560 = vmatprep.subr.mxu0 0.0
    %561 = vmatpush2.msra.mxu0 0.0
    %562 = vmatprep.mubr.f32.mxu0 0.0
    %v563 = vand.u32 %v95, 4294901760
    %v564 = vsub.f32 %v95, %v563
    %v565 = vand.u32 %v564, 4294901760
    %566 = vmatmul.mubr.f32.gmra.mxu0 %v565
    %v567 = vpop.f32.mrf.mxu0
    %v568 = vadd.f32 %v474, %v567
    %v569 = vpop.f32.mrf.mxu0
    %v570 = vadd.f32 %v476, %v569
    %571 = vdwg.mxu0
    %572 = vmatprep.subr.mxu0 0.0
    %573 = vmatpush1.msra.mxu0 0.0
    %574 = vmatprep.subr.mxu0 0.0
    %575 = vmatpush1.msra.mxu0 0.0
    %576 = vmatprep.subr.mxu0 0.0
    %577 = vmatpush1.msra.mxu0 0.0
    %578 = vmatprep.subr.mxu0 0.0
    %579 = vmatpush1.msra.mxu0 0.0
    %580 = vmatprep.subr.mxu0 0.0
    %581 = vmatpush1.msra.mxu0 0.0
    %582 = vmatprep.subr.mxu0 0.0
    %583 = vmatpush1.msra.mxu0 0.0
    %v584 = vand.u32 %v80, 4294901760
    %v585 = vsub.f32 %v80, %v584
    %v586 = vand.u32 %v585, 4294901760
    %587 = vmatprep.subr.mxu0 %v586
    %v588 = vand.u32 %v79, 4294901760
    %v589 = vsub.f32 %v79, %v588
    %v590 = vand.u32 %v589, 4294901760
    %591 = vmatpush1.msra.mxu0 %v590
    %v592 = vand.u32 %v78, 4294901760
    %v593 = vsub.f32 %v78, %v592
    %v594 = vand.u32 %v593, 4294901760
    %595 = vmatprep.subr.mxu0 %v594
    %v596 = vand.u32 %v77, 4294901760
    %v597 = vsub.f32 %v77, %v596
    %v598 = vand.u32 %v597, 4294901760
    %599 = vmatpush1.msra.mxu0 %v598
    %v600 = vand.u32 %v76, 4294901760
    %v601 = vsub.f32 %v76, %v600
    %v602 = vand.u32 %v601, 4294901760
    %603 = vmatprep.subr.mxu0 %v602
    %v604 = vand.u32 %v75, 4294901760
    %v605 = vsub.f32 %v75, %v604
    %v606 = vand.u32 %v605, 4294901760
    %607 = vmatpush1.msra.mxu0 %v606
    %v608 = vand.u32 %v74, 4294901760
    %v609 = vsub.f32 %v74, %v608
    %v610 = vand.u32 %v609, 4294901760
    %611 = vmatprep.subr.mxu0 %v610
    %v612 = vand.u32 %v73, 4294901760
    %v613 = vsub.f32 %v73, %v612
    %v614 = vand.u32 %v613, 4294901760
    %615 = vmatpush1.msra.mxu0 %v614
    %v616 = vand.u32 %v72, 4294901760
    %v617 = vsub.f32 %v72, %v616
    %v618 = vand.u32 %v617, 4294901760
    %619 = vmatprep.subr.mxu0 %v618
    %v620 = vand.u32 %v71, 4294901760
    %v621 = vsub.f32 %v71, %v620
    %v622 = vand.u32 %v621, 4294901760
    %623 = vmatpush1.msra.mxu0 %v622
    %v624 = vand.u32 %v70, 4294901760
    %v625 = vsub.f32 %v70, %v624
    %v626 = vand.u32 %v625, 4294901760
    %627 = vmatprep.subr.mxu0 %v626
    %v628 = vand.u32 %v69, 4294901760
    %v629 = vsub.f32 %v69, %v628
    %v630 = vand.u32 %v629, 4294901760
    %631 = vmatpush1.msra.mxu0 %v630
    %v632 = vand.u32 %v68, 4294901760
    %v633 = vsub.f32 %v68, %v632
    %v634 = vand.u32 %v633, 4294901760
    %635 = vmatprep.subr.mxu0 %v634
    %v636 = vand.u32 %v67, 4294901760
    %v637 = vsub.f32 %v67, %v636
    %v638 = vand.u32 %v637, 4294901760
    %639 = vmatpush1.msra.mxu0 %v638
    %v640 = vand.u32 %v66, 4294901760
    %v641 = vsub.f32 %v66, %v640
    %v642 = vand.u32 %v641, 4294901760
    %643 = vmatprep.subr.mxu0 %v642
    %v644 = vand.u32 %v65, 4294901760
    %v645 = vsub.f32 %v65, %v644
    %v646 = vand.u32 %v645, 4294901760
    %647 = vmatpush1.msra.mxu0 %v646
    %v648 = vand.u32 %v64, 4294901760
    %v649 = vsub.f32 %v64, %v648
    %v650 = vand.u32 %v649, 4294901760
    %651 = vmatprep.subr.mxu0 %v650
    %v652 = vand.u32 %v63, 4294901760
    %v653 = vsub.f32 %v63, %v652
    %v654 = vand.u32 %v653, 4294901760
    %655 = vmatpush1.msra.mxu0 %v654
    %v656 = vand.u32 %v62, 4294901760
    %v657 = vsub.f32 %v62, %v656
    %v658 = vand.u32 %v657, 4294901760
    %659 = vmatprep.subr.mxu0 %v658
    %v660 = vand.u32 %v61, 4294901760
    %v661 = vsub.f32 %v61, %v660
    %v662 = vand.u32 %v661, 4294901760
    %663 = vmatpush1.msra.mxu0 %v662
    %664 = vmatprep.subr.mxu0 0.0
    %665 = vmatpush2.msra.mxu0 0.0
    %666 = vmatprep.subr.mxu0 0.0
    %667 = vmatpush2.msra.mxu0 0.0
    %668 = vmatprep.subr.mxu0 0.0
    %669 = vmatpush2.msra.mxu0 0.0
    %670 = vmatprep.subr.mxu0 0.0
    %671 = vmatpush2.msra.mxu0 0.0
    %672 = vmatprep.subr.mxu0 0.0
    %673 = vmatpush2.msra.mxu0 0.0
    %674 = vmatprep.subr.mxu0 0.0
    %675 = vmatpush2.msra.mxu0 0.0
    %676 = vmatprep.subr.mxu0 0.0
    %677 = vmatpush2.msra.mxu0 0.0
    %678 = vmatprep.subr.mxu0 0.0
    %679 = vmatpush2.msra.mxu0 0.0
    %680 = vmatprep.subr.mxu0 0.0
    %681 = vmatpush2.msra.mxu0 0.0
    %682 = vmatprep.subr.mxu0 0.0
    %683 = vmatpush2.msra.mxu0 0.0
    %684 = vmatprep.subr.mxu0 0.0
    %685 = vmatpush2.msra.mxu0 0.0
    %686 = vmatprep.subr.mxu0 0.0
    %687 = vmatpush2.msra.mxu0 0.0
    %688 = vmatprep.subr.mxu0 0.0
    %689 = vmatpush2.msra.mxu0 0.0
    %690 = vmatprep.subr.mxu0 0.0
    %691 = vmatpush2.msra.mxu0 0.0
    %692 = vmatprep.subr.mxu0 0.0
    %693 = vmatpush2.msra.mxu0 0.0
    %694 = vmatprep.subr.mxu0 0.0
    %695 = vmatpush2.msra.mxu0 0.0
    %696 = vmatprep.mubr.f32.mxu0 0.0
    %v697 = vand.u32 %v95, 4294901760
    %698 = vmatmul.mubr.f32.gmra.mxu0 %v697
    %v699 = vpop.f32.mrf.mxu0
    %v700 = vadd.f32 %v568, %v699
    %v701 = vpop.f32.mrf.mxu0
    %v702 = vadd.f32 %v570, %v701
    %703 = vdwg.mxu0
    %704 = vmatprep.subr.mxu0 0.0
    %705 = vmatpush1.msra.mxu0 0.0
    %706 = vmatprep.subr.mxu0 0.0
    %707 = vmatpush1.msra.mxu0 0.0
    %708 = vmatprep.subr.mxu0 0.0
    %709 = vmatpush1.msra.mxu0 0.0
    %710 = vmatprep.subr.mxu0 0.0
    %711 = vmatpush1.msra.mxu0 0.0
    %712 = vmatprep.subr.mxu0 0.0
    %713 = vmatpush1.msra.mxu0 0.0
    %714 = vmatprep.subr.mxu0 0.0
    %715 = vmatpush1.msra.mxu0 0.0
    %v716 = vand.u32 %v80, 4294901760
    %717 = vmatprep.subr.mxu0 %v716
    %v718 = vand.u32 %v79, 4294901760
    %719 = vmatpush1.msra.mxu0 %v718
    %v720 = vand.u32 %v78, 4294901760
    %721 = vmatprep.subr.mxu0 %v720
    %v722 = vand.u32 %v77, 4294901760
    %723 = vmatpush1.msra.mxu0 %v722
    %v724 = vand.u32 %v76, 4294901760
    %725 = vmatprep.subr.mxu0 %v724
    %v726 = vand.u32 %v75, 4294901760
    %727 = vmatpush1.msra.mxu0 %v726
    %v728 = vand.u32 %v74, 4294901760
    %729 = vmatprep.subr.mxu0 %v728
    %v730 = vand.u32 %v73, 4294901760
    %731 = vmatpush1.msra.mxu0 %v730
    %v732 = vand.u32 %v72, 4294901760
    %733 = vmatprep.subr.mxu0 %v732
    %v734 = vand.u32 %v71, 4294901760
    %735 = vmatpush1.msra.mxu0 %v734
    %v736 = vand.u32 %v70, 4294901760
    %737 = vmatprep.subr.mxu0 %v736
    %v738 = vand.u32 %v69, 4294901760
    %739 = vmatpush1.msra.mxu0 %v738
    %v740 = vand.u32 %v68, 4294901760
    %741 = vmatprep.subr.mxu0 %v740
    %v742 = vand.u32 %v67, 4294901760
    %743 = vmatpush1.msra.mxu0 %v742
    %v744 = vand.u32 %v66, 4294901760
    %745 = vmatprep.subr.mxu0 %v744
    %v746 = vand.u32 %v65, 4294901760
    %747 = vmatpush1.msra.mxu0 %v746
    %v748 = vand.u32 %v64, 4294901760
    %749 = vmatprep.subr.mxu0 %v748
    %v750 = vand.u32 %v63, 4294901760
    %751 = vmatpush1.msra.mxu0 %v750
    %v752 = vand.u32 %v62, 4294901760
    %753 = vmatprep.subr.mxu0 %v752
    %v754 = vand.u32 %v61, 4294901760
    %755 = vmatpush1.msra.mxu0 %v754
    %756 = vmatprep.subr.mxu0 0.0
    %757 = vmatpush2.msra.mxu0 0.0
    %758 = vmatprep.subr.mxu0 0.0
    %759 = vmatpush2.msra.mxu0 0.0
    %760 = vmatprep.subr.mxu0 0.0
    %761 = vmatpush2.msra.mxu0 0.0
    %762 = vmatprep.subr.mxu0 0.0
    %763 = vmatpush2.msra.mxu0 0.0
    %764 = vmatprep.subr.mxu0 0.0
    %765 = vmatpush2.msra.mxu0 0.0
    %766 = vmatprep.subr.mxu0 0.0
    %767 = vmatpush2.msra.mxu0 0.0
    %768 = vmatprep.subr.mxu0 0.0
    %769 = vmatpush2.msra.mxu0 0.0
    %770 = vmatprep.subr.mxu0 0.0
    %771 = vmatpush2.msra.mxu0 0.0
    %772 = vmatprep.subr.mxu0 0.0
    %773 = vmatpush2.msra.mxu0 0.0
    %774 = vmatprep.subr.mxu0 0.0
    %775 = vmatpush2.msra.mxu0 0.0
    %776 = vmatprep.subr.mxu0 0.0
    %777 = vmatpush2.msra.mxu0 0.0
    %778 = vmatprep.subr.mxu0 0.0
    %779 = vmatpush2.msra.mxu0 0.0
    %780 = vmatprep.subr.mxu0 0.0
    %781 = vmatpush2.msra.mxu0 0.0
    %782 = vmatprep.subr.mxu0 0.0
    %783 = vmatpush2.msra.mxu0 0.0
    %784 = vmatprep.subr.mxu0 0.0
    %785 = vmatpush2.msra.mxu0 0.0
    %786 = vmatprep.subr.mxu0 0.0
    %787 = vmatpush2.msra.mxu0 0.0
    %788 = vmatprep.mubr.f32.mxu0 0.0
    %v789 = vand.u32 %v95, 4294901760
    %790 = vmatmul.mubr.f32.gmra.mxu0 %v789
    %v791 = vpop.f32.mrf.mxu0
    %v792 = vadd.f32 %v700, %v791
    %v793 = vpop.f32.mrf.mxu0
    %v794 = vadd.f32 %v702, %v793
    %795 = vdwg.mxu0
    %v796 = vmax.f32 %v792, 0.0
    %v797 = vmax.f32 %v794, 0.0
    %v798 = vld [vmem:[#allocation7] sm:$0xff]
    %v799 = vld [vmem:[#allocation7 + $0x8] sm:$0xff]
    %v800 = vld [vmem:[#allocation7 + $0x10] sm:$0xff]
    %v801 = vld [vmem:[#allocation7 + $0x18] sm:$0xff]
    %v802 = vld [vmem:[#allocation7 + $0x20] sm:$0xff]
    %v803 = vld [vmem:[#allocation7 + $0x28] sm:$0xff]
    %v804 = vld [vmem:[#allocation7 + $0x30] sm:$0xff]
    %v805 = vld [vmem:[#allocation7 + $0x38] sm:$0xff]
    %v806 = vld [vmem:[#allocation7 + $0x40] sm:$0xff]
    %v807 = vld [vmem:[#allocation7 + $0x48] sm:$0xff]
    %v808 = vld [vmem:[#allocation7 + $0x50] sm:$0xff]
    %v809 = vld [vmem:[#allocation7 + $0x58] sm:$0xff]
    %v810 = vld [vmem:[#allocation7 + $0x60] sm:$0xff]
    %v811 = vld [vmem:[#allocation7 + $0x68] sm:$0xff]
    %v812 = vld [vmem:[#allocation7 + $0x70] sm:$0xff]
    %v813 = vld [vmem:[#allocation7 + $0x78] sm:$0xff]
    %v814 = vld [vmem:[#allocation7 + $0x80] sm:$0xff]
    %v815 = vld [vmem:[#allocation7 + $0x88] sm:$0xff]
    %v816 = vld [vmem:[#allocation7 + $0x90] sm:$0xff]
    %v817 = vld [vmem:[#allocation7 + $0x98] sm:$0xff]
    %v818 = vld [vmem:[%s4] sm:$0x1]
    %v820 = vlaneseq
    %v821 = vshrl.u32 %v820, 7
    %v822 = vsub.s32 0, %v821
    %v823 = vrot.slane %v818, %v822
    %vm825 = vcmask 261120
    %v827 = vsel %vm825, %v797, 0
    %829 = vmatprep.subr.mxu0 0.0
    %v830 = vand.u32 %v813, 4294901760
    %831 = vmatpush1.msra.mxu0 %v830
    %832 = vmatprep.subr.mxu0 0.0
    %v833 = vand.u32 %v812, 4294901760
    %834 = vmatpush1.msra.mxu0 %v833
    %835 = vmatprep.subr.mxu0 0.0
    %v836 = vand.u32 %v811, 4294901760
    %837 = vmatpush1.msra.mxu0 %v836
    %838 = vmatprep.subr.mxu0 0.0
    %v839 = vand.u32 %v810, 4294901760
    %840 = vmatpush1.msra.mxu0 %v839
    %841 = vmatprep.subr.mxu0 0.0
    %v842 = vand.u32 %v809, 4294901760
    %843 = vmatpush1.msra.mxu0 %v842
    %844 = vmatprep.subr.mxu0 0.0
    %v845 = vand.u32 %v808, 4294901760
    %846 = vmatpush1.msra.mxu0 %v845
    %847 = vmatprep.subr.mxu0 0.0
    %v848 = vand.u32 %v807, 4294901760
    %849 = vmatpush1.msra.mxu0 %v848
    %850 = vmatprep.subr.mxu0 0.0
    %v851 = vand.u32 %v806, 4294901760
    %852 = vmatpush1.msra.mxu0 %v851
    %853 = vmatprep.subr.mxu0 0.0
    %v854 = vand.u32 %v805, 4294901760
    %855 = vmatpush1.msra.mxu0 %v854
    %856 = vmatprep.subr.mxu0 0.0
    %v857 = vand.u32 %v804, 4294901760
    %858 = vmatpush1.msra.mxu0 %v857
    %859 = vmatprep.subr.mxu0 0.0
    %v860 = vand.u32 %v803, 4294901760
    %861 = vmatpush1.msra.mxu0 %v860
    %862 = vmatprep.subr.mxu0 0.0
    %v863 = vand.u32 %v802, 4294901760
    %864 = vmatpush1.msra.mxu0 %v863
    %865 = vmatprep.subr.mxu0 0.0
    %v866 = vand.u32 %v801, 4294901760
    %867 = vmatpush1.msra.mxu0 %v866
    %868 = vmatprep.subr.mxu0 0.0
    %v869 = vand.u32 %v800, 4294901760
    %870 = vmatpush1.msra.mxu0 %v869
    %871 = vmatprep.subr.mxu0 0.0
    %v872 = vand.u32 %v799, 4294901760
    %873 = vmatpush1.msra.mxu0 %v872
    %874 = vmatprep.subr.mxu0 0.0
    %v875 = vand.u32 %v798, 4294901760
    %876 = vmatpush1.msra.mxu0 %v875
    %877 = vmatprep.subr.mxu0 0.0
    %878 = vmatpush2.msra.mxu0 0.0
    %879 = vmatprep.subr.mxu0 0.0
    %880 = vmatpush2.msra.mxu0 0.0
    %881 = vmatprep.subr.mxu0 0.0
    %882 = vmatpush2.msra.mxu0 0.0
    %883 = vmatprep.subr.mxu0 0.0
    %884 = vmatpush2.msra.mxu0 0.0
    %885 = vmatprep.subr.mxu0 0.0
    %886 = vmatpush2.msra.mxu0 0.0
    %887 = vmatprep.subr.mxu0 0.0
    %888 = vmatpush2.msra.mxu0 0.0
    %889 = vmatprep.subr.mxu0 0.0
    %890 = vmatpush2.msra.mxu0 0.0
    %891 = vmatprep.subr.mxu0 0.0
    %892 = vmatpush2.msra.mxu0 0.0
    %893 = vmatprep.subr.mxu0 0.0
    %894 = vmatpush2.msra.mxu0 0.0
    %895 = vmatprep.subr.mxu0 0.0
    %896 = vmatpush2.msra.mxu0 0.0
    %897 = vmatprep.subr.mxu0 0.0
    %898 = vmatpush2.msra.mxu0 0.0
    %899 = vmatprep.subr.mxu0 0.0
    %900 = vmatpush2.msra.mxu0 0.0
    %901 = vmatprep.subr.mxu0 0.0
    %v902 = vand.u32 %v817, 4294901760
    %903 = vmatpush2.msra.mxu0 %v902
    %904 = vmatprep.subr.mxu0 0.0
    %v905 = vand.u32 %v816, 4294901760
    %906 = vmatpush2.msra.mxu0 %v905
    %907 = vmatprep.subr.mxu0 0.0
    %v908 = vand.u32 %v815, 4294901760
    %909 = vmatpush2.msra.mxu0 %v908
    %910 = vmatprep.subr.mxu0 0.0
    %v911 = vand.u32 %v814, 4294901760
    %912 = vmatpush2.msra.mxu0 %v911
    %v913 = vand.u32 %v827, 4294901760
    %v914 = vsub.f32 %v827, %v913
    %v915 = vand.u32 %v914, 4294901760
    %v916 = vsub.f32 %v914, %v915
    %v917 = vand.u32 %v916, 4294901760
    %918 = vmatprep.mubr.f32.mxu0 %v917
    %v919 = vand.u32 %v796, 4294901760
    %v920 = vsub.f32 %v796, %v919
    %v921 = vand.u32 %v920, 4294901760
    %v922 = vsub.f32 %v920, %v921
    %v923 = vand.u32 %v922, 4294901760
    %924 = vmatmul.mubr.f32.gmra.mxu0 %v923
    %v925 = vpop.f32.mrf.mxu0
    %v926 = vadd.f32 %v823, %v925
    %v927 = vpop.f32.mrf.mxu0
    %928 = vdwg.mxu0
    %929 = vmatprep.subr.mxu0 0.0
    %v930 = vand.u32 %v813, 4294901760
    %v931 = vsub.f32 %v813, %v930
    %v932 = vand.u32 %v931, 4294901760
    %v933 = vsub.f32 %v931, %v932
    %v934 = vand.u32 %v933, 4294901760
    %935 = vmatpush1.msra.mxu0 %v934
    %936 = vmatprep.subr.mxu0 0.0
    %v937 = vand.u32 %v812, 4294901760
    %v938 = vsub.f32 %v812, %v937
    %v939 = vand.u32 %v938, 4294901760
    %v940 = vsub.f32 %v938, %v939
    %v941 = vand.u32 %v940, 4294901760
    %942 = vmatpush1.msra.mxu0 %v941
    %943 = vmatprep.subr.mxu0 0.0
    %v944 = vand.u32 %v811, 4294901760
    %v945 = vsub.f32 %v811, %v944
    %v946 = vand.u32 %v945, 4294901760
    %v947 = vsub.f32 %v945, %v946
    %v948 = vand.u32 %v947, 4294901760
    %949 = vmatpush1.msra.mxu0 %v948
    %950 = vmatprep.subr.mxu0 0.0
    %v951 = vand.u32 %v810, 4294901760
    %v952 = vsub.f32 %v810, %v951
    %v953 = vand.u32 %v952, 4294901760
    %v954 = vsub.f32 %v952, %v953
    %v955 = vand.u32 %v954, 4294901760
    %956 = vmatpush1.msra.mxu0 %v955
    %957 = vmatprep.subr.mxu0 0.0
    %v958 = vand.u32 %v809, 4294901760
    %v959 = vsub.f32 %v809, %v958
    %v960 = vand.u32 %v959, 4294901760
    %v961 = vsub.f32 %v959, %v960
    %v962 = vand.u32 %v961, 4294901760
    %963 = vmatpush1.msra.mxu0 %v962
    %964 = vmatprep.subr.mxu0 0.0
    %v965 = vand.u32 %v808, 4294901760
    %v966 = vsub.f32 %v808, %v965
    %v967 = vand.u32 %v966, 4294901760
    %v968 = vsub.f32 %v966, %v967
    %v969 = vand.u32 %v968, 4294901760
    %970 = vmatpush1.msra.mxu0 %v969
    %971 = vmatprep.subr.mxu0 0.0
    %v972 = vand.u32 %v807, 4294901760
    %v973 = vsub.f32 %v807, %v972
    %v974 = vand.u32 %v973, 4294901760
    %v975 = vsub.f32 %v973, %v974
    %v976 = vand.u32 %v975, 4294901760
    %977 = vmatpush1.msra.mxu0 %v976
    %978 = vmatprep.subr.mxu0 0.0
    %v979 = vand.u32 %v806, 4294901760
    %v980 = vsub.f32 %v806, %v979
    %v981 = vand.u32 %v980, 4294901760
    %v982 = vsub.f32 %v980, %v981
    %v983 = vand.u32 %v982, 4294901760
    %984 = vmatpush1.msra.mxu0 %v983
    %985 = vmatprep.subr.mxu0 0.0
    %v986 = vand.u32 %v805, 4294901760
    %v987 = vsub.f32 %v805, %v986
    %v988 = vand.u32 %v987, 4294901760
    %v989 = vsub.f32 %v987, %v988
    %v990 = vand.u32 %v989, 4294901760
    %991 = vmatpush1.msra.mxu0 %v990
    %992 = vmatprep.subr.mxu0 0.0
    %v993 = vand.u32 %v804, 4294901760
    %v994 = vsub.f32 %v804, %v993
    %v995 = vand.u32 %v994, 4294901760
    %v996 = vsub.f32 %v994, %v995
    %v997 = vand.u32 %v996, 4294901760
    %998 = vmatpush1.msra.mxu0 %v997
    %999 = vmatprep.subr.mxu0 0.0
    %v1000 = vand.u32 %v803, 4294901760
    %v1001 = vsub.f32 %v803, %v1000
    %v1002 = vand.u32 %v1001, 4294901760
    %v1003 = vsub.f32 %v1001, %v1002
    %v1004 = vand.u32 %v1003, 4294901760
    %1005 = vmatpush1.msra.mxu0 %v1004
    %1006 = vmatprep.subr.mxu0 0.0
    %v1007 = vand.u32 %v802, 4294901760
    %v1008 = vsub.f32 %v802, %v1007
    %v1009 = vand.u32 %v1008, 4294901760
    %v1010 = vsub.f32 %v1008, %v1009
    %v1011 = vand.u32 %v1010, 4294901760
    %1012 = vmatpush1.msra.mxu0 %v1011
    %1013 = vmatprep.subr.mxu0 0.0
    %v1014 = vand.u32 %v801, 4294901760
    %v1015 = vsub.f32 %v801, %v1014
    %v1016 = vand.u32 %v1015, 4294901760
    %v1017 = vsub.f32 %v1015, %v1016
    %v1018 = vand.u32 %v1017, 4294901760
    %1019 = vmatpush1.msra.mxu0 %v1018
    %1020 = vmatprep.subr.mxu0 0.0
    %v1021 = vand.u32 %v800, 4294901760
    %v1022 = vsub.f32 %v800, %v1021
    %v1023 = vand.u32 %v1022, 4294901760
    %v1024 = vsub.f32 %v1022, %v1023
    %v1025 = vand.u32 %v1024, 4294901760
    %1026 = vmatpush1.msra.mxu0 %v1025
    %1027 = vmatprep.subr.mxu0 0.0
    %v1028 = vand.u32 %v799, 4294901760
    %v1029 = vsub.f32 %v799, %v1028
    %v1030 = vand.u32 %v1029, 4294901760
    %v1031 = vsub.f32 %v1029, %v1030
    %v1032 = vand.u32 %v1031, 4294901760
    %1033 = vmatpush1.msra.mxu0 %v1032
    %1034 = vmatprep.subr.mxu0 0.0
    %v1035 = vand.u32 %v798, 4294901760
    %v1036 = vsub.f32 %v798, %v1035
    %v1037 = vand.u32 %v1036, 4294901760
    %v1038 = vsub.f32 %v1036, %v1037
    %v1039 = vand.u32 %v1038, 4294901760
    %1040 = vmatpush1.msra.mxu0 %v1039
    %1041 = vmatprep.subr.mxu0 0.0
    %1042 = vmatpush2.msra.mxu0 0.0
    %1043 = vmatprep.subr.mxu0 0.0
    %1044 = vmatpush2.msra.mxu0 0.0
    %1045 = vmatprep.subr.mxu0 0.0
    %1046 = vmatpush2.msra.mxu0 0.0
    %1047 = vmatprep.subr.mxu0 0.0
    %1048 = vmatpush2.msra.mxu0 0.0
    %1049 = vmatprep.subr.mxu0 0.0
    %1050 = vmatpush2.msra.mxu0 0.0
    %1051 = vmatprep.subr.mxu0 0.0
    %1052 = vmatpush2.msra.mxu0 0.0
    %1053 = vmatprep.subr.mxu0 0.0
    %1054 = vmatpush2.msra.mxu0 0.0
    %1055 = vmatprep.subr.mxu0 0.0
    %1056 = vmatpush2.msra.mxu0 0.0
    %1057 = vmatprep.subr.mxu0 0.0
    %1058 = vmatpush2.msra.mxu0 0.0
    %1059 = vmatprep.subr.mxu0 0.0
    %1060 = vmatpush2.msra.mxu0 0.0
    %1061 = vmatprep.subr.mxu0 0.0
    %1062 = vmatpush2.msra.mxu0 0.0
    %1063 = vmatprep.subr.mxu0 0.0
    %1064 = vmatpush2.msra.mxu0 0.0
    %1065 = vmatprep.subr.mxu0 0.0
    %v1066 = vand.u32 %v817, 4294901760
    %v1067 = vsub.f32 %v817, %v1066
    %v1068 = vand.u32 %v1067, 4294901760
    %v1069 = vsub.f32 %v1067, %v1068
    %v1070 = vand.u32 %v1069, 4294901760
    %1071 = vmatpush2.msra.mxu0 %v1070
    %1072 = vmatprep.subr.mxu0 0.0
    %v1073 = vand.u32 %v816, 4294901760
    %v1074 = vsub.f32 %v816, %v1073
    %v1075 = vand.u32 %v1074, 4294901760
    %v1076 = vsub.f32 %v1074, %v1075
    %v1077 = vand.u32 %v1076, 4294901760
    %1078 = vmatpush2.msra.mxu0 %v1077
    %1079 = vmatprep.subr.mxu0 0.0
    %v1080 = vand.u32 %v815, 4294901760
    %v1081 = vsub.f32 %v815, %v1080
    %v1082 = vand.u32 %v1081, 4294901760
    %v1083 = vsub.f32 %v1081, %v1082
    %v1084 = vand.u32 %v1083, 4294901760
    %1085 = vmatpush2.msra.mxu0 %v1084
    %1086 = vmatprep.subr.mxu0 0.0
    %v1087 = vand.u32 %v814, 4294901760
    %v1088 = vsub.f32 %v814, %v1087
    %v1089 = vand.u32 %v1088, 4294901760
    %v1090 = vsub.f32 %v1088, %v1089
    %v1091 = vand.u32 %v1090, 4294901760
    %1092 = vmatpush2.msra.mxu0 %v1091
    %v1093 = vand.u32 %v827, 4294901760
    %1094 = vmatprep.mubr.f32.mxu0 %v1093
    %v1095 = vand.u32 %v796, 4294901760
    %1096 = vmatmul.mubr.f32.gmra.mxu0 %v1095
    %v1097 = vpop.f32.mrf.mxu0
    %v1098 = vadd.f32 %v926, %v1097
    %v1099 = vpop.f32.mrf.mxu0
    %1100 = vdwg.mxu0
    %1101 = vmatprep.subr.mxu0 0.0
    %v1102 = vand.u32 %v813, 4294901760
    %v1103 = vsub.f32 %v813, %v1102
    %1104 = vmatpush1.msra.mxu0 %v1103
    %1105 = vmatprep.subr.mxu0 0.0
    %v1106 = vand.u32 %v812, 4294901760
    %v1107 = vsub.f32 %v812, %v1106
    %1108 = vmatpush1.msra.mxu0 %v1107
    %1109 = vmatprep.subr.mxu0 0.0
    %v1110 = vand.u32 %v811, 4294901760
    %v1111 = vsub.f32 %v811, %v1110
    %1112 = vmatpush1.msra.mxu0 %v1111
    %1113 = vmatprep.subr.mxu0 0.0
    %v1114 = vand.u32 %v810, 4294901760
    %v1115 = vsub.f32 %v810, %v1114
    %1116 = vmatpush1.msra.mxu0 %v1115
    %1117 = vmatprep.subr.mxu0 0.0
    %v1118 = vand.u32 %v809, 4294901760
    %v1119 = vsub.f32 %v809, %v1118
    %1120 = vmatpush1.msra.mxu0 %v1119
    %1121 = vmatprep.subr.mxu0 0.0
    %v1122 = vand.u32 %v808, 4294901760
    %v1123 = vsub.f32 %v808, %v1122
    %1124 = vmatpush1.msra.mxu0 %v1123
    %1125 = vmatprep.subr.mxu0 0.0
    %v1126 = vand.u32 %v807, 4294901760
    %v1127 = vsub.f32 %v807, %v1126
    %1128 = vmatpush1.msra.mxu0 %v1127
    %1129 = vmatprep.subr.mxu0 0.0
    %v1130 = vand.u32 %v806, 4294901760
    %v1131 = vsub.f32 %v806, %v1130
    %1132 = vmatpush1.msra.mxu0 %v1131
    %1133 = vmatprep.subr.mxu0 0.0
    %v1134 = vand.u32 %v805, 4294901760
    %v1135 = vsub.f32 %v805, %v1134
    %1136 = vmatpush1.msra.mxu0 %v1135
    %1137 = vmatprep.subr.mxu0 0.0
    %v1138 = vand.u32 %v804, 4294901760
    %v1139 = vsub.f32 %v804, %v1138
    %1140 = vmatpush1.msra.mxu0 %v1139
    %1141 = vmatprep.subr.mxu0 0.0
    %v1142 = vand.u32 %v803, 4294901760
    %v1143 = vsub.f32 %v803, %v1142
    %1144 = vmatpush1.msra.mxu0 %v1143
    %1145 = vmatprep.subr.mxu0 0.0
    %v1146 = vand.u32 %v802, 4294901760
    %v1147 = vsub.f32 %v802, %v1146
    %1148 = vmatpush1.msra.mxu0 %v1147
    %1149 = vmatprep.subr.mxu0 0.0
    %v1150 = vand.u32 %v801, 4294901760
    %v1151 = vsub.f32 %v801, %v1150
    %1152 = vmatpush1.msra.mxu0 %v1151
    %1153 = vmatprep.subr.mxu0 0.0
    %v1154 = vand.u32 %v800, 4294901760
    %v1155 = vsub.f32 %v800, %v1154
    %1156 = vmatpush1.msra.mxu0 %v1155
    %1157 = vmatprep.subr.mxu0 0.0
    %v1158 = vand.u32 %v799, 4294901760
    %v1159 = vsub.f32 %v799, %v1158
    %1160 = vmatpush1.msra.mxu0 %v1159
    %1161 = vmatprep.subr.mxu0 0.0
    %v1162 = vand.u32 %v798, 4294901760
    %v1163 = vsub.f32 %v798, %v1162
    %1164 = vmatpush1.msra.mxu0 %v1163
    %1165 = vmatprep.subr.mxu0 0.0
    %1166 = vmatpush2.msra.mxu0 0.0
    %1167 = vmatprep.subr.mxu0 0.0
    %1168 = vmatpush2.msra.mxu0 0.0
    %1169 = vmatprep.subr.mxu0 0.0
    %1170 = vmatpush2.msra.mxu0 0.0
    %1171 = vmatprep.subr.mxu0 0.0
    %1172 = vmatpush2.msra.mxu0 0.0
    %1173 = vmatprep.subr.mxu0 0.0
    %1174 = vmatpush2.msra.mxu0 0.0
    %1175 = vmatprep.subr.mxu0 0.0
    %1176 = vmatpush2.msra.mxu0 0.0
    %1177 = vmatprep.subr.mxu0 0.0
    %1178 = vmatpush2.msra.mxu0 0.0
    %1179 = vmatprep.subr.mxu0 0.0
    %1180 = vmatpush2.msra.mxu0 0.0
    %1181 = vmatprep.subr.mxu0 0.0
    %1182 = vmatpush2.msra.mxu0 0.0
    %1183 = vmatprep.subr.mxu0 0.0
    %1184 = vmatpush2.msra.mxu0 0.0
    %1185 = vmatprep.subr.mxu0 0.0
    %1186 = vmatpush2.msra.mxu0 0.0
    %1187 = vmatprep.subr.mxu0 0.0
    %1188 = vmatpush2.msra.mxu0 0.0
    %1189 = vmatprep.subr.mxu0 0.0
    %v1190 = vand.u32 %v817, 4294901760
    %v1191 = vsub.f32 %v817, %v1190
    %1192 = vmatpush2.msra.mxu0 %v1191
    %1193 = vmatprep.subr.mxu0 0.0
    %v1194 = vand.u32 %v816, 4294901760
    %v1195 = vsub.f32 %v816, %v1194
    %1196 = vmatpush2.msra.mxu0 %v1195
    %1197 = vmatprep.subr.mxu0 0.0
    %v1198 = vand.u32 %v815, 4294901760
    %v1199 = vsub.f32 %v815, %v1198
    %1200 = vmatpush2.msra.mxu0 %v1199
    %1201 = vmatprep.subr.mxu0 0.0
    %v1202 = vand.u32 %v814, 4294901760
    %v1203 = vsub.f32 %v814, %v1202
    %1204 = vmatpush2.msra.mxu0 %v1203
    %v1205 = vand.u32 %v827, 4294901760
    %v1206 = vsub.f32 %v827, %v1205
    %1207 = vmatprep.mubr.f32.mxu0 %v1206
    %v1208 = vand.u32 %v796, 4294901760
    %v1209 = vsub.f32 %v796, %v1208
    %1210 = vmatmul.mubr.f32.gmra.mxu0 %v1209
    %v1211 = vpop.f32.mrf.mxu0
    %v1212 = vadd.f32 %v1098, %v1211
    %v1213 = vpop.f32.mrf.mxu0
    %1214 = vdwg.mxu0
    %1215 = vmatprep.subr.mxu0 0.0
    %v1216 = vand.u32 %v813, 4294901760
    %1217 = vmatpush1.msra.mxu0 %v1216
    %1218 = vmatprep.subr.mxu0 0.0
    %v1219 = vand.u32 %v812, 4294901760
    %1220 = vmatpush1.msra.mxu0 %v1219
    %1221 = vmatprep.subr.mxu0 0.0
    %v1222 = vand.u32 %v811, 4294901760
    %1223 = vmatpush1.msra.mxu0 %v1222
    %1224 = vmatprep.subr.mxu0 0.0
    %v1225 = vand.u32 %v810, 4294901760
    %1226 = vmatpush1.msra.mxu0 %v1225
    %1227 = vmatprep.subr.mxu0 0.0
    %v1228 = vand.u32 %v809, 4294901760
    %1229 = vmatpush1.msra.mxu0 %v1228
    %1230 = vmatprep.subr.mxu0 0.0
    %v1231 = vand.u32 %v808, 4294901760
    %1232 = vmatpush1.msra.mxu0 %v1231
    %1233 = vmatprep.subr.mxu0 0.0
    %v1234 = vand.u32 %v807, 4294901760
    %1235 = vmatpush1.msra.mxu0 %v1234
    %1236 = vmatprep.subr.mxu0 0.0
    %v1237 = vand.u32 %v806, 4294901760
    %1238 = vmatpush1.msra.mxu0 %v1237
    %1239 = vmatprep.subr.mxu0 0.0
    %v1240 = vand.u32 %v805, 4294901760
    %1241 = vmatpush1.msra.mxu0 %v1240
    %1242 = vmatprep.subr.mxu0 0.0
    %v1243 = vand.u32 %v804, 4294901760
    %1244 = vmatpush1.msra.mxu0 %v1243
    %1245 = vmatprep.subr.mxu0 0.0
    %v1246 = vand.u32 %v803, 4294901760
    %1247 = vmatpush1.msra.mxu0 %v1246
    %1248 = vmatprep.subr.mxu0 0.0
    %v1249 = vand.u32 %v802, 4294901760
    %1250 = vmatpush1.msra.mxu0 %v1249
    %1251 = vmatprep.subr.mxu0 0.0
    %v1252 = vand.u32 %v801, 4294901760
    %1253 = vmatpush1.msra.mxu0 %v1252
    %1254 = vmatprep.subr.mxu0 0.0
    %v1255 = vand.u32 %v800, 4294901760
    %1256 = vmatpush1.msra.mxu0 %v1255
    %1257 = vmatprep.subr.mxu0 0.0
    %v1258 = vand.u32 %v799, 4294901760
    %1259 = vmatpush1.msra.mxu0 %v1258
    %1260 = vmatprep.subr.mxu0 0.0
    %v1261 = vand.u32 %v798, 4294901760
    %1262 = vmatpush1.msra.mxu0 %v1261
    %1263 = vmatprep.subr.mxu0 0.0
    %1264 = vmatpush2.msra.mxu0 0.0
    %1265 = vmatprep.subr.mxu0 0.0
    %1266 = vmatpush2.msra.mxu0 0.0
    %1267 = vmatprep.subr.mxu0 0.0
    %1268 = vmatpush2.msra.mxu0 0.0
    %1269 = vmatprep.subr.mxu0 0.0
    %1270 = vmatpush2.msra.mxu0 0.0
    %1271 = vmatprep.subr.mxu0 0.0
    %1272 = vmatpush2.msra.mxu0 0.0
    %1273 = vmatprep.subr.mxu0 0.0
    %1274 = vmatpush2.msra.mxu0 0.0
    %1275 = vmatprep.subr.mxu0 0.0
    %1276 = vmatpush2.msra.mxu0 0.0
    %1277 = vmatprep.subr.mxu0 0.0
    %1278 = vmatpush2.msra.mxu0 0.0
    %1279 = vmatprep.subr.mxu0 0.0
    %1280 = vmatpush2.msra.mxu0 0.0
    %1281 = vmatprep.subr.mxu0 0.0
    %1282 = vmatpush2.msra.mxu0 0.0
    %1283 = vmatprep.subr.mxu0 0.0
    %1284 = vmatpush2.msra.mxu0 0.0
    %1285 = vmatprep.subr.mxu0 0.0
    %1286 = vmatpush2.msra.mxu0 0.0
    %1287 = vmatprep.subr.mxu0 0.0
    %v1288 = vand.u32 %v817, 4294901760
    %1289 = vmatpush2.msra.mxu0 %v1288
    %1290 = vmatprep.subr.mxu0 0.0
    %v1291 = vand.u32 %v816, 4294901760
    %1292 = vmatpush2.msra.mxu0 %v1291
    %1293 = vmatprep.subr.mxu0 0.0
    %v1294 = vand.u32 %v815, 4294901760
    %1295 = vmatpush2.msra.mxu0 %v1294
    %1296 = vmatprep.subr.mxu0 0.0
    %v1297 = vand.u32 %v814, 4294901760
    %1298 = vmatpush2.msra.mxu0 %v1297
    %v1299 = vand.u32 %v827, 4294901760
    %v1300 = vsub.f32 %v827, %v1299
    %v1301 = vand.u32 %v1300, 4294901760
    %1302 = vmatprep.mubr.f32.mxu0 %v1301
    %v1303 = vand.u32 %v796, 4294901760
    %v1304 = vsub.f32 %v796, %v1303
    %v1305 = vand.u32 %v1304, 4294901760
    %1306 = vmatmul.mubr.f32.gmra.mxu0 %v1305
    %v1307 = vpop.f32.mrf.mxu0
    %v1308 = vadd.f32 %v1212, %v1307
    %v1309 = vpop.f32.mrf.mxu0
    %1310 = vdwg.mxu0
    %1311 = vmatprep.subr.mxu0 0.0
    %v1312 = vand.u32 %v813, 4294901760
    %v1313 = vsub.f32 %v813, %v1312
    %v1314 = vand.u32 %v1313, 4294901760
    %1315 = vmatpush1.msra.mxu0 %v1314
    %1316 = vmatprep.subr.mxu0 0.0
    %v1317 = vand.u32 %v812, 4294901760
    %v1318 = vsub.f32 %v812, %v1317
    %v1319 = vand.u32 %v1318, 4294901760
    %1320 = vmatpush1.msra.mxu0 %v1319
    %1321 = vmatprep.subr.mxu0 0.0
    %v1322 = vand.u32 %v811, 4294901760
    %v1323 = vsub.f32 %v811, %v1322
    %v1324 = vand.u32 %v1323, 4294901760
    %1325 = vmatpush1.msra.mxu0 %v1324
    %1326 = vmatprep.subr.mxu0 0.0
    %v1327 = vand.u32 %v810, 4294901760
    %v1328 = vsub.f32 %v810, %v1327
    %v1329 = vand.u32 %v1328, 4294901760
    %1330 = vmatpush1.msra.mxu0 %v1329
    %1331 = vmatprep.subr.mxu0 0.0
    %v1332 = vand.u32 %v809, 4294901760
    %v1333 = vsub.f32 %v809, %v1332
    %v1334 = vand.u32 %v1333, 4294901760
    %1335 = vmatpush1.msra.mxu0 %v1334
    %1336 = vmatprep.subr.mxu0 0.0
    %v1337 = vand.u32 %v808, 4294901760
    %v1338 = vsub.f32 %v808, %v1337
    %v1339 = vand.u32 %v1338, 4294901760
    %1340 = vmatpush1.msra.mxu0 %v1339
    %1341 = vmatprep.subr.mxu0 0.0
    %v1342 = vand.u32 %v807, 4294901760
    %v1343 = vsub.f32 %v807, %v1342
    %v1344 = vand.u32 %v1343, 4294901760
    %1345 = vmatpush1.msra.mxu0 %v1344
    %1346 = vmatprep.subr.mxu0 0.0
    %v1347 = vand.u32 %v806, 4294901760
    %v1348 = vsub.f32 %v806, %v1347
    %v1349 = vand.u32 %v1348, 4294901760
    %1350 = vmatpush1.msra.mxu0 %v1349
    %1351 = vmatprep.subr.mxu0 0.0
    %v1352 = vand.u32 %v805, 4294901760
    %v1353 = vsub.f32 %v805, %v1352
    %v1354 = vand.u32 %v1353, 4294901760
    %1355 = vmatpush1.msra.mxu0 %v1354
    %1356 = vmatprep.subr.mxu0 0.0
    %v1357 = vand.u32 %v804, 4294901760
    %v1358 = vsub.f32 %v804, %v1357
    %v1359 = vand.u32 %v1358, 4294901760
    %1360 = vmatpush1.msra.mxu0 %v1359
    %1361 = vmatprep.subr.mxu0 0.0
    %v1362 = vand.u32 %v803, 4294901760
    %v1363 = vsub.f32 %v803, %v1362
    %v1364 = vand.u32 %v1363, 4294901760
    %1365 = vmatpush1.msra.mxu0 %v1364
    %1366 = vmatprep.subr.mxu0 0.0
    %v1367 = vand.u32 %v802, 4294901760
    %v1368 = vsub.f32 %v802, %v1367
    %v1369 = vand.u32 %v1368, 4294901760
    %1370 = vmatpush1.msra.mxu0 %v1369
    %1371 = vmatprep.subr.mxu0 0.0
    %v1372 = vand.u32 %v801, 4294901760
    %v1373 = vsub.f32 %v801, %v1372
    %v1374 = vand.u32 %v1373, 4294901760
    %1375 = vmatpush1.msra.mxu0 %v1374
    %1376 = vmatprep.subr.mxu0 0.0
    %v1377 = vand.u32 %v800, 4294901760
    %v1378 = vsub.f32 %v800, %v1377
    %v1379 = vand.u32 %v1378, 4294901760
    %1380 = vmatpush1.msra.mxu0 %v1379
    %1381 = vmatprep.subr.mxu0 0.0
    %v1382 = vand.u32 %v799, 4294901760
    %v1383 = vsub.f32 %v799, %v1382
    %v1384 = vand.u32 %v1383, 4294901760
    %1385 = vmatpush1.msra.mxu0 %v1384
    %1386 = vmatprep.subr.mxu0 0.0
    %v1387 = vand.u32 %v798, 4294901760
    %v1388 = vsub.f32 %v798, %v1387
    %v1389 = vand.u32 %v1388, 4294901760
    %1390 = vmatpush1.msra.mxu0 %v1389
    %1391 = vmatprep.subr.mxu0 0.0
    %1392 = vmatpush2.msra.mxu0 0.0
    %1393 = vmatprep.subr.mxu0 0.0
    %1394 = vmatpush2.msra.mxu0 0.0
    %1395 = vmatprep.subr.mxu0 0.0
    %1396 = vmatpush2.msra.mxu0 0.0
    %1397 = vmatprep.subr.mxu0 0.0
    %1398 = vmatpush2.msra.mxu0 0.0
    %1399 = vmatprep.subr.mxu0 0.0
    %1400 = vmatpush2.msra.mxu0 0.0
    %1401 = vmatprep.subr.mxu0 0.0
    %1402 = vmatpush2.msra.mxu0 0.0
    %1403 = vmatprep.subr.mxu0 0.0
    %1404 = vmatpush2.msra.mxu0 0.0
    %1405 = vmatprep.subr.mxu0 0.0
    %1406 = vmatpush2.msra.mxu0 0.0
    %1407 = vmatprep.subr.mxu0 0.0
    %1408 = vmatpush2.msra.mxu0 0.0
    %1409 = vmatprep.subr.mxu0 0.0
    %1410 = vmatpush2.msra.mxu0 0.0
    %1411 = vmatprep.subr.mxu0 0.0
    %1412 = vmatpush2.msra.mxu0 0.0
    %1413 = vmatprep.subr.mxu0 0.0
    %1414 = vmatpush2.msra.mxu0 0.0
    %1415 = vmatprep.subr.mxu0 0.0
    %v1416 = vand.u32 %v817, 4294901760
    %v1417 = vsub.f32 %v817, %v1416
    %v1418 = vand.u32 %v1417, 4294901760
    %1419 = vmatpush2.msra.mxu0 %v1418
    %1420 = vmatprep.subr.mxu0 0.0
    %v1421 = vand.u32 %v816, 4294901760
    %v1422 = vsub.f32 %v816, %v1421
    %v1423 = vand.u32 %v1422, 4294901760
    %1424 = vmatpush2.msra.mxu0 %v1423
    %1425 = vmatprep.subr.mxu0 0.0
    %v1426 = vand.u32 %v815, 4294901760
    %v1427 = vsub.f32 %v815, %v1426
    %v1428 = vand.u32 %v1427, 4294901760
    %1429 = vmatpush2.msra.mxu0 %v1428
    %1430 = vmatprep.subr.mxu0 0.0
    %v1431 = vand.u32 %v814, 4294901760
    %v1432 = vsub.f32 %v814, %v1431
    %v1433 = vand.u32 %v1432, 4294901760
    %1434 = vmatpush2.msra.mxu0 %v1433
    %v1435 = vand.u32 %v827, 4294901760
    %1436 = vmatprep.mubr.f32.mxu0 %v1435
    %v1437 = vand.u32 %v796, 4294901760
    %1438 = vmatmul.mubr.f32.gmra.mxu0 %v1437
    %v1439 = vpop.f32.mrf.mxu0
    %v1440 = vadd.f32 %v1308, %v1439
    %v1441 = vpop.f32.mrf.mxu0
    %1442 = vdwg.mxu0
    %1443 = vmatprep.subr.mxu0 0.0
    %v1444 = vand.u32 %v813, 4294901760
    %1445 = vmatpush1.msra.mxu0 %v1444
    %1446 = vmatprep.subr.mxu0 0.0
    %v1447 = vand.u32 %v812, 4294901760
    %1448 = vmatpush1.msra.mxu0 %v1447
    %1449 = vmatprep.subr.mxu0 0.0
    %v1450 = vand.u32 %v811, 4294901760
    %1451 = vmatpush1.msra.mxu0 %v1450
    %1452 = vmatprep.subr.mxu0 0.0
    %v1453 = vand.u32 %v810, 4294901760
    %1454 = vmatpush1.msra.mxu0 %v1453
    %1455 = vmatprep.subr.mxu0 0.0
    %v1456 = vand.u32 %v809, 4294901760
    %1457 = vmatpush1.msra.mxu0 %v1456
    %1458 = vmatprep.subr.mxu0 0.0
    %v1459 = vand.u32 %v808, 4294901760
    %1460 = vmatpush1.msra.mxu0 %v1459
    %1461 = vmatprep.subr.mxu0 0.0
    %v1462 = vand.u32 %v807, 4294901760
    %1463 = vmatpush1.msra.mxu0 %v1462
    %1464 = vmatprep.subr.mxu0 0.0
    %v1465 = vand.u32 %v806, 4294901760
    %1466 = vmatpush1.msra.mxu0 %v1465
    %1467 = vmatprep.subr.mxu0 0.0
    %v1468 = vand.u32 %v805, 4294901760
    %1469 = vmatpush1.msra.mxu0 %v1468
    %1470 = vmatprep.subr.mxu0 0.0
    %v1471 = vand.u32 %v804, 4294901760
    %1472 = vmatpush1.msra.mxu0 %v1471
    %1473 = vmatprep.subr.mxu0 0.0
    %v1474 = vand.u32 %v803, 4294901760
    %1475 = vmatpush1.msra.mxu0 %v1474
    %1476 = vmatprep.subr.mxu0 0.0
    %v1477 = vand.u32 %v802, 4294901760
    %1478 = vmatpush1.msra.mxu0 %v1477
    %1479 = vmatprep.subr.mxu0 0.0
    %v1480 = vand.u32 %v801, 4294901760
    %1481 = vmatpush1.msra.mxu0 %v1480
    %1482 = vmatprep.subr.mxu0 0.0
    %v1483 = vand.u32 %v800, 4294901760
    %1484 = vmatpush1.msra.mxu0 %v1483
    %1485 = vmatprep.subr.mxu0 0.0
    %v1486 = vand.u32 %v799, 4294901760
    %1487 = vmatpush1.msra.mxu0 %v1486
    %1488 = vmatprep.subr.mxu0 0.0
    %v1489 = vand.u32 %v798, 4294901760
    %1490 = vmatpush1.msra.mxu0 %v1489
    %1491 = vmatprep.subr.mxu0 0.0
    %1492 = vmatpush2.msra.mxu0 0.0
    %1493 = vmatprep.subr.mxu0 0.0
    %1494 = vmatpush2.msra.mxu0 0.0
    %1495 = vmatprep.subr.mxu0 0.0
    %1496 = vmatpush2.msra.mxu0 0.0
    %1497 = vmatprep.subr.mxu0 0.0
    %1498 = vmatpush2.msra.mxu0 0.0
    %1499 = vmatprep.subr.mxu0 0.0
    %1500 = vmatpush2.msra.mxu0 0.0
    %1501 = vmatprep.subr.mxu0 0.0
    %1502 = vmatpush2.msra.mxu0 0.0
    %1503 = vmatprep.subr.mxu0 0.0
    %1504 = vmatpush2.msra.mxu0 0.0
    %1505 = vmatprep.subr.mxu0 0.0
    %1506 = vmatpush2.msra.mxu0 0.0
    %1507 = vmatprep.subr.mxu0 0.0
    %1508 = vmatpush2.msra.mxu0 0.0
    %1509 = vmatprep.subr.mxu0 0.0
    %1510 = vmatpush2.msra.mxu0 0.0
    %1511 = vmatprep.subr.mxu0 0.0
    %1512 = vmatpush2.msra.mxu0 0.0
    %1513 = vmatprep.subr.mxu0 0.0
    %1514 = vmatpush2.msra.mxu0 0.0
    %1515 = vmatprep.subr.mxu0 0.0
    %v1516 = vand.u32 %v817, 4294901760
    %1517 = vmatpush2.msra.mxu0 %v1516
    %1518 = vmatprep.subr.mxu0 0.0
    %v1519 = vand.u32 %v816, 4294901760
    %1520 = vmatpush2.msra.mxu0 %v1519
    %1521 = vmatprep.subr.mxu0 0.0
    %v1522 = vand.u32 %v815, 4294901760
    %1523 = vmatpush2.msra.mxu0 %v1522
    %1524 = vmatprep.subr.mxu0 0.0
    %v1525 = vand.u32 %v814, 4294901760
    %1526 = vmatpush2.msra.mxu0 %v1525
    %v1527 = vand.u32 %v827, 4294901760
    %1528 = vmatprep.mubr.f32.mxu0 %v1527
    %v1529 = vand.u32 %v796, 4294901760
    %1530 = vmatmul.mubr.f32.gmra.mxu0 %v1529
    %v1531 = vpop.f32.mrf.mxu0
    %v1532 = vadd.f32 %v1440, %v1531
    %v1533 = vpop.f32.mrf.mxu0
    %1534 = vdwg.mxu0
    %1535 = vst [vmem:[#allocation8] sm:$0x7] %v1532
    // Predicated region
    $region34: #{tpu_custom_call.1} parent=1 // pred_check
      _
    $region35: #{tpu_custom_call.1} parent=1 // pred_check_branch
      %1537 = sbr.rel (0) target = $region37
    $region36: #{tpu_custom_call.1} parent=1 // pred_region
      %s1539 = ssub.s32 64, 64
      %1540 = vsyncadd [#allocation4], %s1539
      %s1542 = sshll.u32 [#allocation8], 4
      %s1543 = int_to_ptr.vmem [resolvable:$true] %s1542
      %1545 = dma.vmem_to_hbm [thread:$0]  %s1543, 64, %s5, [#allocation4]
    $region37: #{tpu_custom_call.1} parent=1 // pred_fallthru
      _
    // Predicated region
    $region38: #{tpu_custom_call.1} parent=1 // pred_check
      _
    $region39: #{tpu_custom_call.1} parent=1 // pred_check_branch
      %1547 = sbr.rel (0) target = $region41
    $region40: #{tpu_custom_call.1} parent=1 // pred_region
      %1548 = dma.done [#allocation4], 64
    $region41: #{tpu_custom_call.1} parent=1 // pred_fallthru
      _
    %1549 = vsyncpa [#allocation3], 1
    %1550 = vsyncpa [#allocation6], 1
    %1551 = vsyncpa [#allocation4], 1

</llo_original>
